<compile_context>
chip_gen: v6e
topology: v6e:2x2x1
jax: 0.10.0
libtpu: 0.0.40
codegen_flags: <defaults>
</compile_context>

<pallas_src>
import jax
import jax.numpy as jnp
from jax.experimental import pallas as pl
from jax.experimental.pallas import tpu as pltpu


def _haar_down_kernel(x_ref, o_ref):
    # x_ref block: (1, Cb, Hob, 2*W) : original rows (2*h, 2*h+1) packed
    #              side-by-side along the last (lane) axis.
    # o_ref block: (1, 4, Cb, Hob*Wo): subband-major, lane-dense spatial slab.
    x = x_ref[0]                          # (Cb, Hob, 2W)
    Cb, Hob, W2 = x.shape
    W = W2 // 2
    Wo = W // 2

    top = x[:, :, :W]                     # even input rows  (a|b lane-interleaved)
    bot = x[:, :, W:]                     # odd input rows   (c|d lane-interleaved)

    # Row butterfly on full-width, contiguous lane slices (pure VPU adds).
    rs = top + bot                        # even lanes: a+c, odd lanes: b+d
    rd = top - bot                        # even lanes: a-c, odd lanes: b-d

    # Column (lane-parity) deinterleave, once per row-parity partial (XLU),
    # straight into the lane-dense output layout.
    rs4 = rs.reshape(Cb, Hob, Wo, 2)
    rd4 = rd.reshape(Cb, Hob, Wo, 2)
    se = rs4[..., 0].reshape(Cb, Hob * Wo)   # a+c
    so = rs4[..., 1].reshape(Cb, Hob * Wo)   # b+d
    de = rd4[..., 0].reshape(Cb, Hob * Wo)   # a-c
    do = rd4[..., 1].reshape(Cb, Hob * Wo)   # b-d

    q = jnp.asarray(0.25, dtype=x.dtype)
    # Haar subbands (PyTorch conv weights, then /4):
    #   sub0 = a+b+c+d, sub1 = a-b+c-d, sub2 = a+b-c-d, sub3 = a-b-c+d
    o_ref[0, 0] = (se + so) * q
    o_ref[0, 1] = (se - so) * q
    o_ref[0, 2] = (de + do) * q
    o_ref[0, 3] = (de - do) * q


def _pick_blocks(C, Ho, Wo, row_bytes, target_bytes=2 << 20):
    """Choose (Cb, Hob): the largest block <= target_bytes that satisfies the
    (8, 128) BlockSpec rules for both the input and the output layouts.

    Legal channel blocks: C itself, or divisors of C that are multiples of 8
    (output block's second-to-last dim).  Legal row blocks: Ho itself, or
    divisors of Ho that are multiples of 8 (input block's second-to-last dim)
    with Hob*Wo a multiple of 128 (output block's lane dim).
    """
    c_cands = [C] + sorted((cb for cb in range(8, C, 8) if C % cb == 0),
                           reverse=True)
    h_cands = [Ho] + sorted((hb for hb in range(8, Ho, 8)
                             if Ho % hb == 0 and (hb * Wo) % 128 == 0),
                            reverse=True)
    best = None
    for cb in c_cands:
        for hb in h_cands:            # descending: first fit is largest hb
            if cb * hb * row_bytes <= target_bytes:
                if best is None or cb * hb > best[0] * best[1]:
                    best = (cb, hb)
                break
    if best is not None:
        return best
    # Nothing fits the target: fall back to the smallest legal block and let
    # the wrapper raise the scoped-VMEM limit.
    return min(c_cands), min(h_cands)


def _haar_downsampling_impl(x):
    """Equivalent to HaarDownsampling.forward(x, rev=False).

    x: (B, C, H, W), H and W even.  returns: (B, 4*C, H//2, W//2).
    """
    B, C, H, W = x.shape
    assert H % 2 == 0 and W % 2 == 0, "H and W must be even"
    Ho, Wo = H // 2, W // 2
    itemsize = jnp.dtype(x.dtype).itemsize
    row_bytes = 2 * W * itemsize            # one packed row = 2 original rows
    Cb, Hob = _pick_blocks(C, Ho, Wo, row_bytes)

    # Free reshape: pack each pair of input rows side by side along the last
    # axis so the kernel's row split is a contiguous lane slice.
    x_packed = x.reshape(B, C, Ho, 2 * W)

    grid = (B, C // Cb, Ho // Hob)
    in_spec = pl.BlockSpec((1, Cb, Hob, 2 * W), lambda b, c, h: (b, c, h, 0))
    out_spec = pl.BlockSpec((1, 4, Cb, Hob * Wo), lambda b, c, h: (b, 0, c, h))

    # Double-buffered input + output working set.  Only raise the scoped VMEM
    # limit when the (fallback) block actually needs it.
    block_bytes = Cb * Hob * row_bytes      # output block bytes == input block bytes
    vmem_needed = 4 * block_bytes + (2 << 20)
    compiler_kwargs = dict(
        dimension_semantics=("parallel", "parallel", "parallel"))
    if vmem_needed > (14 << 20):
        compiler_kwargs["vmem_limit_bytes"] = int(min(vmem_needed, 128 << 20))

    out = pl.pallas_call(
        _haar_down_kernel,
        out_shape=jax.ShapeDtypeStruct((B, 4, C, Ho * Wo), x.dtype),
        grid_spec=pltpu.PrefetchScalarGridSpec(
            num_scalar_prefetch=0,
            grid=grid,
            in_specs=[in_spec],
            out_specs=out_spec,
        ),
        compiler_params=pltpu.CompilerParams(**compiler_kwargs),
        cost_estimate=pl.CostEstimate(
            flops=3 * B * C * H * W,
            transcendentals=0,
            bytes_accessed=2 * B * C * H * W * itemsize,
        ),
    )(x_packed)

    # Free reshape: (B, 4, C, Ho*Wo) -> (B, 4*C, Ho, Wo), matching the PyTorch
    # transpose(1, 2) + reshape layout (subband-major, channel-minor).
    return out.reshape(B, 4 * C, Ho, Wo)


haar_downsampling = jax.jit(_haar_downsampling_impl)


def _haar_reference(x):
    """Pure-jnp reference mirroring the PyTorch forward (rev=False)."""
    B, C, H, W = x.shape
    xr = x.reshape(B, C, H // 2, 2, W // 2, 2)
    a = xr[:, :, :, 0, :, 0]
    b = xr[:, :, :, 0, :, 1]
    c = xr[:, :, :, 1, :, 0]
    d = xr[:, :, :, 1, :, 1]
    out = jnp.stack(
        [
            (a + b + c + d) * 0.25,
            (a - b + c - d) * 0.25,
            (a + b - c - d) * 0.25,
            (a - b - c + d) * 0.25,
        ],
        axis=1,
    )  # (B, 4, C, Ho, Wo)
    return out.reshape(B, 4 * C, H // 2, W // 2)


if __name__ == "__main__":
    key = jax.random.PRNGKey(0)
    k1, k2 = jax.random.split(key)

    # Primary small case (matches the module's typical NCHW usage).
    B, C, H, W = 2, 4, 16, 16
    x = jax.random.normal(k1, (B, C, H, W), dtype=jnp.float32)
    y = jax.block_until_ready(haar_downsampling(x))
    y_ref = _haar_reference(x)
    assert y.shape == (B, 4 * C, H // 2, W // 2)
    assert jnp.allclose(y, y_ref, atol=1e-5, rtol=1e-5)

    # Second small case: more channels / wider plane (lane-dense output slab).
    x2 = jax.random.normal(k2, (1, 8, 32, 32), dtype=jnp.float32)
    y2 = jax.block_until_ready(haar_downsampling(x2))
    y2_ref = _haar_reference(x2)
    assert y2.shape == (1, 32, 16, 16)
    assert jnp.allclose(y2, y2_ref, atol=1e-5, rtol=1e-5)

    print("KERNEL_OK")
</pallas_src>

<mosaic_0001>
module attributes {stable_mosaic.version = 11 : i64} {
  func.func @_haar_down_kernel(%arg0: i32, %arg1: i32, %arg2: i32, %arg3: memref<1x4x8x32xf32, #tpu.memory_space<vmem>>, %arg4: memref<1x4x4x64xf32, #tpu.memory_space<vmem>>) attributes {dimension_semantics = [#tpu.dimension_semantics<parallel>, #tpu.dimension_semantics<parallel>, #tpu.dimension_semantics<parallel>], iteration_bounds = array<i64: 2, 1, 1>, scalar_prefetch = 0 : i64, scratch_operands = 0 : i64, tpu.core_type = #tpu.core_type<tc>, window_params = [{transform_indices = @transform_0, window_bounds = array<i64: 1, 4, 8, 32>}, {transform_indices = @transform_1, window_bounds = array<i64: 1, 4, 4, 64>}]} {
    %c0 = arith.constant 0 : index
    %c0_0 = arith.constant 0 : index
    %c0_1 = arith.constant 0 : index
    %c0_2 = arith.constant 0 : index
    %0 = vector.load %arg3[%c0, %c0_0, %c0_1, %c0_2] : memref<1x4x8x32xf32, #tpu.memory_space<vmem>>, vector<1x4x8x32xf32>
    %1 = vector.shape_cast %0 : vector<1x4x8x32xf32> to vector<4x8x32xf32>
    %2 = vector.extract_strided_slice %1 {offsets = [0, 0, 0], sizes = [4, 8, 16], strides = [1, 1, 1]} : vector<4x8x32xf32> to vector<4x8x16xf32>
    %3 = vector.extract_strided_slice %1 {offsets = [0, 0, 16], sizes = [4, 8, 16], strides = [1, 1, 1]} : vector<4x8x32xf32> to vector<4x8x16xf32>
    %4 = arith.addf %2, %3 : vector<4x8x16xf32>
    %5 = arith.subf %2, %3 : vector<4x8x16xf32>
    %6 = vector.shape_cast %4 : vector<4x8x16xf32> to vector<4x8x8x2xf32>
    %7 = vector.shape_cast %5 : vector<4x8x16xf32> to vector<4x8x8x2xf32>
    %8 = vector.extract_strided_slice %6 {offsets = [0, 0, 0, 0], sizes = [4, 8, 8, 1], strides = [1, 1, 1, 1]} : vector<4x8x8x2xf32> to vector<4x8x8x1xf32>
    %9 = vector.shape_cast %8 : vector<4x8x8x1xf32> to vector<4x8x8xf32>
    %10 = vector.shape_cast %9 : vector<4x8x8xf32> to vector<4x64xf32>
    %11 = vector.extract_strided_slice %6 {offsets = [0, 0, 0, 1], sizes = [4, 8, 8, 1], strides = [1, 1, 1, 1]} : vector<4x8x8x2xf32> to vector<4x8x8x1xf32>
    %12 = vector.shape_cast %11 : vector<4x8x8x1xf32> to vector<4x8x8xf32>
    %13 = vector.shape_cast %12 : vector<4x8x8xf32> to vector<4x64xf32>
    %14 = vector.extract_strided_slice %7 {offsets = [0, 0, 0, 0], sizes = [4, 8, 8, 1], strides = [1, 1, 1, 1]} : vector<4x8x8x2xf32> to vector<4x8x8x1xf32>
    %15 = vector.shape_cast %14 : vector<4x8x8x1xf32> to vector<4x8x8xf32>
    %16 = vector.shape_cast %15 : vector<4x8x8xf32> to vector<4x64xf32>
    %17 = vector.extract_strided_slice %7 {offsets = [0, 0, 0, 1], sizes = [4, 8, 8, 1], strides = [1, 1, 1, 1]} : vector<4x8x8x2xf32> to vector<4x8x8x1xf32>
    %18 = vector.shape_cast %17 : vector<4x8x8x1xf32> to vector<4x8x8xf32>
    %19 = vector.shape_cast %18 : vector<4x8x8xf32> to vector<4x64xf32>
    %20 = arith.addf %10, %13 : vector<4x64xf32>
    %cst = arith.constant 2.500000e-01 : f32
    %21 = vector.broadcast %cst : f32 to vector<4x64xf32>
    %22 = arith.mulf %20, %21 : vector<4x64xf32>
    %c0_3 = arith.constant 0 : index
    %c0_4 = arith.constant 0 : index
    %c0_5 = arith.constant 0 : index
    %c0_6 = arith.constant 0 : index
    %23 = vector.load %arg4[%c0_3, %c0_4, %c0_5, %c0_6] : memref<1x4x4x64xf32, #tpu.memory_space<vmem>>, vector<1x1x4x64xf32>
    %24 = vector.shape_cast %23 : vector<1x1x4x64xf32> to vector<4x64xf32>
    %25 = vector.shape_cast %22 : vector<4x64xf32> to vector<1x1x4x64xf32>
    tpu.vector_store %arg4[%c0_3, %c0_4, %c0_5, %c0_6], %25 {strides = array<i32>} : memref<1x4x4x64xf32, #tpu.memory_space<vmem>>, vector<1x1x4x64xf32>,
    %26 = arith.subf %10, %13 : vector<4x64xf32>
    %cst_7 = arith.constant 2.500000e-01 : f32
    %27 = vector.broadcast %cst_7 : f32 to vector<4x64xf32>
    %28 = arith.mulf %26, %27 : vector<4x64xf32>
    %c0_8 = arith.constant 0 : index
    %c1 = arith.constant 1 : index
    %c0_9 = arith.constant 0 : index
    %c0_10 = arith.constant 0 : index
    %29 = vector.load %arg4[%c0_8, %c1, %c0_9, %c0_10] : memref<1x4x4x64xf32, #tpu.memory_space<vmem>>, vector<1x1x4x64xf32>
    %30 = vector.shape_cast %29 : vector<1x1x4x64xf32> to vector<4x64xf32>
    %31 = vector.shape_cast %28 : vector<4x64xf32> to vector<1x1x4x64xf32>
    tpu.vector_store %arg4[%c0_8, %c1, %c0_9, %c0_10], %31 {strides = array<i32>} : memref<1x4x4x64xf32, #tpu.memory_space<vmem>>, vector<1x1x4x64xf32>,
    %32 = arith.addf %16, %19 : vector<4x64xf32>
    %cst_11 = arith.constant 2.500000e-01 : f32
    %33 = vector.broadcast %cst_11 : f32 to vector<4x64xf32>
    %34 = arith.mulf %32, %33 : vector<4x64xf32>
    %c0_12 = arith.constant 0 : index
    %c2 = arith.constant 2 : index
    %c0_13 = arith.constant 0 : index
    %c0_14 = arith.constant 0 : index
    %35 = vector.load %arg4[%c0_12, %c2, %c0_13, %c0_14] : memref<1x4x4x64xf32, #tpu.memory_space<vmem>>, vector<1x1x4x64xf32>
    %36 = vector.shape_cast %35 : vector<1x1x4x64xf32> to vector<4x64xf32>
    %37 = vector.shape_cast %34 : vector<4x64xf32> to vector<1x1x4x64xf32>
    tpu.vector_store %arg4[%c0_12, %c2, %c0_13, %c0_14], %37 {strides = array<i32>} : memref<1x4x4x64xf32, #tpu.memory_space<vmem>>, vector<1x1x4x64xf32>,
    %38 = arith.subf %16, %19 : vector<4x64xf32>
    %cst_15 = arith.constant 2.500000e-01 : f32
    %39 = vector.broadcast %cst_15 : f32 to vector<4x64xf32>
    %40 = arith.mulf %38, %39 : vector<4x64xf32>
    %c0_16 = arith.constant 0 : index
    %c3 = arith.constant 3 : index
    %c0_17 = arith.constant 0 : index
    %c0_18 = arith.constant 0 : index
    %41 = vector.load %arg4[%c0_16, %c3, %c0_17, %c0_18] : memref<1x4x4x64xf32, #tpu.memory_space<vmem>>, vector<1x1x4x64xf32>
    %42 = vector.shape_cast %41 : vector<1x1x4x64xf32> to vector<4x64xf32>
    %43 = vector.shape_cast %40 : vector<4x64xf32> to vector<1x1x4x64xf32>
    tpu.vector_store %arg4[%c0_16, %c3, %c0_17, %c0_18], %43 {strides = array<i32>} : memref<1x4x4x64xf32, #tpu.memory_space<vmem>>, vector<1x1x4x64xf32>,
    return
  }
  func.func @transform_0(%arg0: i32, %arg1: i32, %arg2: i32) -> (i32, i32, i32, i32) {
    %c0_i32 = arith.constant 0 : i32
    %c0_i32_0 = arith.constant 0 : i32
    return %arg0, %arg1, %arg2, %c0_i32 : i32, i32, i32, i32
  }
  func.func @transform_1(%arg0: i32, %arg1: i32, %arg2: i32) -> (i32, i32, i32, i32) {
    %c0_i32 = arith.constant 0 : i32
    %c0_i32_0 = arith.constant 0 : i32
    return %arg0, %c0_i32, %arg1, %arg2 : i32, i32, i32, i32
  }
}

</mosaic_0001>

<llo_original>
// kernel: _haar_downsampling_impl.1
$region0: #{_haar_downsampling_impl.1}
  #allocation0 [shape = 'u32[]', space=smem, size = 0x4, offset = 0x4, fixed_abs, tag = 'smem constant byte address 0x4 - core index']
  #allocation1 [shape = 'u32[144,128]{1,0:T(1,128)}', space=vmem, size = 0x12000, scoped, tag = 'internal scratch']
  %s0 = inlined_call_operand.vmem [shape: f32[2,4,8,32], index: 0, kind: input, shape index: {}]
  %s1 = inlined_call_operand.vmem [shape: f32[2,4,4,64], index: 1, kind: output, shape index: {}]
  %s2 = sld [smem:[#allocation0]]
  $region37: #{_haar_downsampling_impl.1} parent=0
    _
  %s4 = ssub.s32 1, %s2
  %s5 = scalar_select 0, %s4, %s2
  loop: start=0, step=1, limit=4
  $region2: #{_haar_downsampling_impl.1} parent=0 // loop_pre_header
    _
  $region3: #{_haar_downsampling_impl.1} parent=0 // loop_header
    %s7 = sphi 0, %s11
    %p8 = scmp.ge.s32.totalorder %s7, 4
    %s14 = sphi 0, %s33
    %s15 = sphi 0, %s29
    %s16 = sphi 0, %s25
    %s17 = sphi 0, %s14
    %s18 = sphi 0, %s15
    %s19 = sphi 0, %s16
    %s20 = sphi 0, %s17
    %s21 = sphi 0, %s18
    %s22 = sphi 0, %s19
    %s40 = sphi 0, %s42
    %s43 = sphi 0, %s40
    %s44 = sphi 0, %s43
    %s60 = sphi 0, %s44
    %s70 = sphi 0, %s72
    %s73 = sphi 0, %s70
    %s74 = sphi 0, %s73
    %s90 = sphi 0, %s74
  $region4: #{_haar_downsampling_impl.1} parent=0 // loop_header_branch
    %10 = sbr.rel (%p8) target = $region8
  $region5: #{_haar_downsampling_impl.1} parent=0 // loop_body
    %s12 = ssub.s32 %s7, 1
    %s13 = ssub.s32 %s7, 2
    %s23 = sadd.s32 1, %s16
    %p24 = scmp.ge.s32.totalorder %s23, 1
    %s25 = scalar_select %p24, 0, %s23
    %s26 = sadd.s32 1, %s15
    %s27 = scalar_select %p24, %s26, %s15
    %p28 = scmp.ge.s32.totalorder %s27, 1
    %s29 = scalar_select %p28, 0, %s27
    %s30 = sadd.s32 1, %s14
    %s31 = scalar_select %p28, %s30, %s14
    %p32 = scmp.ge.s32.totalorder %s31, 2
    %s33 = scalar_select %p32, 0, %s31
    %s34 = ssub.s32 %s14, %s33
    %s35 = ssub.s32 %s15, %s29
    %s36 = sor.u32 %s34, %s35
    %s37 = ssub.s32 %s16, %s25
    %s38 = sor.u32 %s36, %s37
    %p39 = scmp.eq.s32.totalorder %s38, 0
    %s41 = sadd.s32 %s40, 1
    %s42 = scalar_select %p39, %s40, %s41
    %p45 = pneg %p39
    %p46 = scmp.eq.s32.totalorder %s7, 1
    %p47 = por %p45, %p46
    %p48 = scmp.ne.s32.totalorder %s40, %s43
    %p49 = scmp.eq.s32.totalorder %s7, 0
    %p50 = por %p48, %p49
    %p51 = scmp.ne.s32.totalorder %s40, %s43
    %p52 = scmp.eq.s32.totalorder %s12, 1
    %p53 = por %p51, %p52
    %p54 = scmp.ne.s32.totalorder %s43, %s44
    %p55 = scmp.eq.s32.totalorder %s12, 0
    %p56 = por %p54, %p55
    %p57 = scmp.ne.s32.totalorder %s43, %s44
    %p58 = scmp.eq.s32.totalorder %s13, 1
    %p59 = por %p57, %p58
    %p61 = scmp.ne.s32.totalorder %s44, %s60
    %p62 = scmp.eq.s32.totalorder %s13, 0
    %p63 = por %p61, %p62
    %s64 = ssub.s32 %s14, %s33
    %s65 = ssub.s32 %s15, %s29
    %s66 = sor.u32 %s64, %s65
    %s67 = ssub.s32 %s16, %s25
    %s68 = sor.u32 %s66, %s67
    %p69 = scmp.eq.s32.totalorder %s68, 0
    %s71 = sadd.s32 %s70, 1
    %s72 = scalar_select %p69, %s70, %s71
    %p75 = pneg %p69
    %p76 = scmp.eq.s32.totalorder %s7, 1
    %p77 = por %p75, %p76
    %p78 = scmp.ne.s32.totalorder %s70, %s73
    %p79 = scmp.eq.s32.totalorder %s7, 0
    %p80 = por %p78, %p79
    %p81 = scmp.ne.s32.totalorder %s70, %s73
    %p82 = scmp.eq.s32.totalorder %s12, 1
    %p83 = por %p81, %p82
    %p84 = scmp.ne.s32.totalorder %s73, %s74
    %p85 = scmp.eq.s32.totalorder %s12, 0
    %p86 = por %p84, %p85
    %p87 = scmp.ne.s32.totalorder %s73, %s74
    %p88 = scmp.eq.s32.totalorder %s13, 1
    %p89 = por %p87, %p88
    %p91 = scmp.ne.s32.totalorder %s74, %s90
    %p92 = scmp.eq.s32.totalorder %s13, 0
    %p93 = por %p91, %p92
    %p94 = scmp.le.s32.totalorder 1, %s7
    %p95 = scmp.lt.s32.totalorder %s7, 3
    %p96 = pnand %p94, %p95
    %p97 = pneg %p96
    // Predicated region
    $region9: #{_haar_downsampling_impl.1} parent=5 // pred_check
      _
    $region10: #{_haar_downsampling_impl.1} parent=5 // pred_check_branch
      %99 = sbr.rel (%p96) target = $region12
    $region11: #{_haar_downsampling_impl.1} parent=5 // pred_region
      %s100 = ssub.s32 %s7, 1
    $region12: #{_haar_downsampling_impl.1} parent=5 // pred_fallthru
      _
    %p101 = scmp.lt.s32.totalorder %s7, 2
    // Predicated region
    $region13: #{_haar_downsampling_impl.1} parent=5 // pred_check
      %p102 = pneg %p101
    $region14: #{_haar_downsampling_impl.1} parent=5 // pred_check_branch
      %104 = sbr.rel (%p102) target = $region16
    $region15: #{_haar_downsampling_impl.1} parent=5 // pred_region
      // Predicated region
      $region17: #{_haar_downsampling_impl.1} parent=15 // pred_check
        %p105 = pneg %p50
      $region18: #{_haar_downsampling_impl.1} parent=15 // pred_check_branch
        %107 = sbr.rel (%p105) target = $region20
      $region19: #{_haar_downsampling_impl.1} parent=15 // pred_region
        %s108 = smul.u32 4, %s15
        %p109 = scmp.lt.s32.totalorder %s14, 1
        %s110 = scalar_select %p109, %s14, 1
        %p111 = scmp.lt.s32.totalorder %s108, 3
        %s112 = scalar_select %p111, %s108, 3
        %p113 = scmp.lt.s32.totalorder %s16, 0
        %s114 = scalar_select %p113, %s16, 0
        %s115 = sadd.s32 %s114, %s112
        %s116 = smul.addr %s110, 4
        %s117 = sadd.s32 %s115, %s116
        %s118 = smul.addr %s117, 8
        %s119 = scalar_lea.vmem %s0, %s118
        %s120 = smul.u32 4, %s15
      $region20: #{_haar_downsampling_impl.1} parent=15 // pred_fallthru
        _
    $region16: #{_haar_downsampling_impl.1} parent=5 // pred_fallthru
      _
    %p121 = scmp.le.s32.totalorder 1, %s7
    %p122 = scmp.lt.s32.totalorder %s7, 3
    %p123 = pnand %p121, %p122
    %p124 = pneg %p123
    // Predicated region
    $region21: #{_haar_downsampling_impl.1} parent=5 // pred_check
      _
    $region22: #{_haar_downsampling_impl.1} parent=5 // pred_check_branch
      %126 = sbr.rel (%p123) target = $region24
    $region23: #{_haar_downsampling_impl.1} parent=5 // pred_region
      %s127 = ssub.s32 %s7, 1
      %s128 = smul.u32 4, %s18
      %p129 = scmp.lt.s32.totalorder %s17, 1
      %s130 = scalar_select %p129, %s17, 1
      %p131 = scmp.lt.s32.totalorder %s128, 3
      %s132 = scalar_select %p131, %s128, 3
      %p133 = scmp.lt.s32.totalorder %s19, 0
      %s134 = scalar_select %p133, %s19, 0
      %s135 = sadd.s32 %s134, %s132
      %s136 = smul.addr %s130, 4
      %s137 = sadd.s32 %s135, %s136
      %s138 = smul.addr %s137, 8
      %s139 = scalar_lea.vmem %s0, %s138
      %p140 = pneg %p56
      %p141 = pneg %p53
      %p142 = pneg %p86
      %p143 = pneg %p83
      %p144 = scmp.lt.s32.totalorder %s17, 1
      %s145 = scalar_select %p144, %s17, 1
      %p146 = scmp.lt.s32.totalorder %s18, 0
      %s147 = scalar_select %p146, %s18, 0
      %p148 = scmp.lt.s32.totalorder %s19, 0
      %s149 = scalar_select %p148, %s19, 0
      %s150 = sadd.s32 %s149, %s147
      %s151 = smul.addr %s145, 4
      %s152 = sadd.s32 %s150, %s151
      %s153 = smul.addr %s152, 4
      %s154 = scalar_lea.vmem %s1, %s153
      %s155 = smul.u32 4, %s18
      %p156 = scmp.lt.s32.totalorder %s17, 1
      %s157 = scalar_select %p156, %s17, 1
      %p158 = scmp.lt.s32.totalorder %s155, 3
      %s159 = scalar_select %p158, %s155, 3
      %p160 = scmp.lt.s32.totalorder %s19, 0
      %s161 = scalar_select %p160, %s19, 0
      %s162 = sadd.s32 %s161, %s159
      %s163 = smul.addr %s157, 4
      %s164 = sadd.s32 %s162, %s163
      %s165 = smul.addr %s164, 8
      %s166 = scalar_lea.vmem %s0, %s165
      %s167 = smul.u32 4, %s18
      %p168 = scmp.lt.s32.totalorder %s17, 1
      %s169 = scalar_select %p168, %s17, 1
      %p170 = scmp.lt.s32.totalorder %s18, 0
      %s171 = scalar_select %p170, %s18, 0
      %p172 = scmp.lt.s32.totalorder %s19, 0
      %s173 = scalar_select %p172, %s19, 0
      %s174 = sadd.s32 %s173, %s171
      %s175 = smul.addr %s169, 4
      %s176 = sadd.s32 %s174, %s175
      %s177 = smul.addr %s176, 4
      %s178 = scalar_lea.vmem %s1, %s177
      %v179 = vld [vmem:[%s166] sm:$0xff]
      %v180 = vld [vmem:[%s166 + $0x8] sm:$0xff]
      %v181 = vld [vmem:[%s166 + $0x10] sm:$0xff]
      %v182 = vld [vmem:[%s166 + $0x18] sm:$0xff]
      %187 = vrot.lane.b32.xlu0 %v179, 112
      %v188 = vpop.permute.xlu0 %187
      %189 = vrot.lane.b32.xlu0 %v180, 112
      %v190 = vpop.permute.xlu0 %189
      %191 = vrot.lane.b32.xlu0 %v181, 112
      %v192 = vpop.permute.xlu0 %191
      %193 = vrot.lane.b32.xlu0 %v182, 112
      %v194 = vpop.permute.xlu0 %193
      %v199 = vadd.f32 %v179, %v188
      %v200 = vadd.f32 %v180, %v190
      %v201 = vadd.f32 %v181, %v192
      %v202 = vadd.f32 %v182, %v194
      %v203 = vsub.f32 %v179, %v188
      %v204 = vsub.f32 %v180, %v190
      %v205 = vsub.f32 %v181, %v192
      %v206 = vsub.f32 %v182, %v194
      %211 = vrot.lane.b32.xlu0 %v199, 126
      %v212 = vpop.permute.xlu0 %211
      %213 = vrot.lane.b32.xlu0 %v200, 126
      %v214 = vpop.permute.xlu0 %213
      %215 = vrot.lane.b32.xlu0 %v201, 126
      %v216 = vpop.permute.xlu0 %215
      %217 = vrot.lane.b32.xlu0 %v202, 126
      %v218 = vpop.permute.xlu0 %217
      %223 = vrot.lane.b32.xlu0 %v199, 124
      %v224 = vpop.permute.xlu0 %223
      %225 = vrot.lane.b32.xlu0 %v200, 124
      %v226 = vpop.permute.xlu0 %225
      %227 = vrot.lane.b32.xlu0 %v201, 124
      %v228 = vpop.permute.xlu0 %227
      %229 = vrot.lane.b32.xlu0 %v202, 124
      %v230 = vpop.permute.xlu0 %229
      %235 = vrot.lane.b32.xlu0 %v199, 122
      %v236 = vpop.permute.xlu0 %235
      %237 = vrot.lane.b32.xlu0 %v200, 122
      %v238 = vpop.permute.xlu0 %237
      %239 = vrot.lane.b32.xlu0 %v201, 122
      %v240 = vpop.permute.xlu0 %239
      %241 = vrot.lane.b32.xlu0 %v202, 122
      %v242 = vpop.permute.xlu0 %241
      %247 = vrot.lane.b32.xlu0 %v199, 120
      %v248 = vpop.permute.xlu0 %247
      %249 = vrot.lane.b32.xlu0 %v200, 120
      %v250 = vpop.permute.xlu0 %249
      %251 = vrot.lane.b32.xlu0 %v201, 120
      %v252 = vpop.permute.xlu0 %251
      %253 = vrot.lane.b32.xlu0 %v202, 120
      %v254 = vpop.permute.xlu0 %253
      %259 = vrot.lane.b32.xlu0 %v199, 118
      %v260 = vpop.permute.xlu0 %259
      %261 = vrot.lane.b32.xlu0 %v200, 118
      %v262 = vpop.permute.xlu0 %261
      %263 = vrot.lane.b32.xlu0 %v201, 118
      %v264 = vpop.permute.xlu0 %263
      %265 = vrot.lane.b32.xlu0 %v202, 118
      %v266 = vpop.permute.xlu0 %265
      %271 = vrot.lane.b32.xlu0 %v199, 116
      %v272 = vpop.permute.xlu0 %271
      %273 = vrot.lane.b32.xlu0 %v200, 116
      %v274 = vpop.permute.xlu0 %273
      %275 = vrot.lane.b32.xlu0 %v201, 116
      %v276 = vpop.permute.xlu0 %275
      %277 = vrot.lane.b32.xlu0 %v202, 116
      %v278 = vpop.permute.xlu0 %277
      %283 = vrot.lane.b32.xlu0 %v199, 114
      %v284 = vpop.permute.xlu0 %283
      %285 = vrot.lane.b32.xlu0 %v200, 114
      %v286 = vpop.permute.xlu0 %285
      %287 = vrot.lane.b32.xlu0 %v201, 114
      %v288 = vpop.permute.xlu0 %287
      %289 = vrot.lane.b32.xlu0 %v202, 114
      %v290 = vpop.permute.xlu0 %289
      %v295 = vcombine.low %v199, %v224
      %v296 = vcombine.high %v199, %v224
      %v298 = vunpack.c.l.s4 1983009808
      %v299 = vunpack.c.0.s8 %v298
      %v300 = vlaneseq
      %v301 = vshrl.u32 %v300, 7
      %v302 = vsub.s32 %v299, %v301
      %v303 = vrot.slane %v295, %v302
      %v305 = vunpack.c.l.s4 1983009808
      %v306 = vunpack.c.0.s8 %v305
      %v307 = vlaneseq
      %v308 = vshrl.u32 %v307, 7
      %v309 = vsub.s32 %v306, %v308
      %v310 = vrot.slane %v296, %v309
      %v311 = vcombine.low %v212, %v236
      %v312 = vcombine.high %v212, %v236
      %v314 = vunpack.c.l.s4 1983009808
      %v315 = vunpack.c.0.s8 %v314
      %v316 = vlaneseq
      %v317 = vshrl.u32 %v316, 7
      %v318 = vsub.s32 %v315, %v317
      %v319 = vrot.slane %v311, %v318
      %v321 = vunpack.c.l.s4 1983009808
      %v322 = vunpack.c.0.s8 %v321
      %v323 = vlaneseq
      %v324 = vshrl.u32 %v323, 7
      %v325 = vsub.s32 %v322, %v324
      %v326 = vrot.slane %v312, %v325
      %v327 = vcombine.low %v248, %v272
      %v328 = vcombine.high %v248, %v272
      %v330 = vunpack.c.l.s4 1983009808
      %v331 = vunpack.c.0.s8 %v330
      %v332 = vlaneseq
      %v333 = vshrl.u32 %v332, 7
      %v334 = vsub.s32 %v331, %v333
      %v335 = vrot.slane %v327, %v334
      %v337 = vunpack.c.l.s4 1983009808
      %v338 = vunpack.c.0.s8 %v337
      %v339 = vlaneseq
      %v340 = vshrl.u32 %v339, 7
      %v341 = vsub.s32 %v338, %v340
      %v342 = vrot.slane %v328, %v341
      %v343 = vcombine.low %v260, %v284
      %v344 = vcombine.high %v260, %v284
      %v346 = vunpack.c.l.s4 1983009808
      %v347 = vunpack.c.0.s8 %v346
      %v348 = vlaneseq
      %v349 = vshrl.u32 %v348, 7
      %v350 = vsub.s32 %v347, %v349
      %v351 = vrot.slane %v343, %v350
      %v353 = vunpack.c.l.s4 1983009808
      %v354 = vunpack.c.0.s8 %v353
      %v355 = vlaneseq
      %v356 = vshrl.u32 %v355, 7
      %v357 = vsub.s32 %v354, %v356
      %v358 = vrot.slane %v344, %v357
      %v359 = vcombine.low %v303, %v319
      %v360 = vcombine.high %v303, %v319
      %v362 = vunpack.c.l.s4 1934713408
      %v363 = vunpack.c.0.s8 %v362
      %v364 = vlaneseq
      %v365 = vshrl.u32 %v364, 7
      %v366 = vsub.s32 %v363, %v365
      %v367 = vrot.slane %v359, %v366
      %v369 = vunpack.c.l.s4 1934713408
      %v370 = vunpack.c.0.s8 %v369
      %v371 = vlaneseq
      %v372 = vshrl.u32 %v371, 7
      %v373 = vsub.s32 %v370, %v372
      %v374 = vrot.slane %v360, %v373
      %v375 = vcombine.low %v310, %v326
      %v376 = vcombine.high %v310, %v326
      %v378 = vunpack.c.l.s4 1934713408
      %v379 = vunpack.c.0.s8 %v378
      %v380 = vlaneseq
      %v381 = vshrl.u32 %v380, 7
      %v382 = vsub.s32 %v379, %v381
      %v383 = vrot.slane %v375, %v382
      %v385 = vunpack.c.l.s4 1934713408
      %v386 = vunpack.c.0.s8 %v385
      %v387 = vlaneseq
      %v388 = vshrl.u32 %v387, 7
      %v389 = vsub.s32 %v386, %v388
      %v390 = vrot.slane %v376, %v389
      %v391 = vcombine.low %v335, %v351
      %v392 = vcombine.high %v335, %v351
      %v394 = vunpack.c.l.s4 1934713408
      %v395 = vunpack.c.0.s8 %v394
      %v396 = vlaneseq
      %v397 = vshrl.u32 %v396, 7
      %v398 = vsub.s32 %v395, %v397
      %v399 = vrot.slane %v391, %v398
      %v401 = vunpack.c.l.s4 1934713408
      %v402 = vunpack.c.0.s8 %v401
      %v403 = vlaneseq
      %v404 = vshrl.u32 %v403, 7
      %v405 = vsub.s32 %v402, %v404
      %v406 = vrot.slane %v392, %v405
      %v407 = vcombine.low %v342, %v358
      %v408 = vcombine.high %v342, %v358
      %v410 = vunpack.c.l.s4 1934713408
      %v411 = vunpack.c.0.s8 %v410
      %v412 = vlaneseq
      %v413 = vshrl.u32 %v412, 7
      %v414 = vsub.s32 %v411, %v413
      %v415 = vrot.slane %v407, %v414
      %v417 = vunpack.c.l.s4 1934713408
      %v418 = vunpack.c.0.s8 %v417
      %v419 = vlaneseq
      %v420 = vshrl.u32 %v419, 7
      %v421 = vsub.s32 %v418, %v420
      %v422 = vrot.slane %v408, %v421
      %v423 = vcombine.low %v367, %v399
      %v424 = vcombine.high %v367, %v399
      %v425 = vcombine.low %v374, %v406
      %v426 = vcombine.high %v374, %v406
      %v427 = vcombine.low %v383, %v415
      %v428 = vcombine.high %v383, %v415
      %v429 = vcombine.low %v390, %v422
      %v430 = vcombine.high %v390, %v422
      %v431 = vcombine.low %v200, %v226
      %v432 = vcombine.high %v200, %v226
      %v434 = vunpack.c.l.s4 1983009808
      %v435 = vunpack.c.0.s8 %v434
      %v436 = vlaneseq
      %v437 = vshrl.u32 %v436, 7
      %v438 = vsub.s32 %v435, %v437
      %v439 = vrot.slane %v431, %v438
      %v441 = vunpack.c.l.s4 1983009808
      %v442 = vunpack.c.0.s8 %v441
      %v443 = vlaneseq
      %v444 = vshrl.u32 %v443, 7
      %v445 = vsub.s32 %v442, %v444
      %v446 = vrot.slane %v432, %v445
      %v447 = vcombine.low %v214, %v238
      %v448 = vcombine.high %v214, %v238
      %v450 = vunpack.c.l.s4 1983009808
      %v451 = vunpack.c.0.s8 %v450
      %v452 = vlaneseq
      %v453 = vshrl.u32 %v452, 7
      %v454 = vsub.s32 %v451, %v453
      %v455 = vrot.slane %v447, %v454
      %v457 = vunpack.c.l.s4 1983009808
      %v458 = vunpack.c.0.s8 %v457
      %v459 = vlaneseq
      %v460 = vshrl.u32 %v459, 7
      %v461 = vsub.s32 %v458, %v460
      %v462 = vrot.slane %v448, %v461
      %v463 = vcombine.low %v250, %v274
      %v464 = vcombine.high %v250, %v274
      %v466 = vunpack.c.l.s4 1983009808
      %v467 = vunpack.c.0.s8 %v466
      %v468 = vlaneseq
      %v469 = vshrl.u32 %v468, 7
      %v470 = vsub.s32 %v467, %v469
      %v471 = vrot.slane %v463, %v470
      %v473 = vunpack.c.l.s4 1983009808
      %v474 = vunpack.c.0.s8 %v473
      %v475 = vlaneseq
      %v476 = vshrl.u32 %v475, 7
      %v477 = vsub.s32 %v474, %v476
      %v478 = vrot.slane %v464, %v477
      %v479 = vcombine.low %v262, %v286
      %v480 = vcombine.high %v262, %v286
      %v482 = vunpack.c.l.s4 1983009808
      %v483 = vunpack.c.0.s8 %v482
      %v484 = vlaneseq
      %v485 = vshrl.u32 %v484, 7
      %v486 = vsub.s32 %v483, %v485
      %v487 = vrot.slane %v479, %v486
      %v489 = vunpack.c.l.s4 1983009808
      %v490 = vunpack.c.0.s8 %v489
      %v491 = vlaneseq
      %v492 = vshrl.u32 %v491, 7
      %v493 = vsub.s32 %v490, %v492
      %v494 = vrot.slane %v480, %v493
      %v495 = vcombine.low %v439, %v455
      %v496 = vcombine.high %v439, %v455
      %v498 = vunpack.c.l.s4 1934713408
      %v499 = vunpack.c.0.s8 %v498
      %v500 = vlaneseq
      %v501 = vshrl.u32 %v500, 7
      %v502 = vsub.s32 %v499, %v501
      %v503 = vrot.slane %v495, %v502
      %v505 = vunpack.c.l.s4 1934713408
      %v506 = vunpack.c.0.s8 %v505
      %v507 = vlaneseq
      %v508 = vshrl.u32 %v507, 7
      %v509 = vsub.s32 %v506, %v508
      %v510 = vrot.slane %v496, %v509
      %v511 = vcombine.low %v446, %v462
      %v512 = vcombine.high %v446, %v462
      %v514 = vunpack.c.l.s4 1934713408
      %v515 = vunpack.c.0.s8 %v514
      %v516 = vlaneseq
      %v517 = vshrl.u32 %v516, 7
      %v518 = vsub.s32 %v515, %v517
      %v519 = vrot.slane %v511, %v518
      %v521 = vunpack.c.l.s4 1934713408
      %v522 = vunpack.c.0.s8 %v521
      %v523 = vlaneseq
      %v524 = vshrl.u32 %v523, 7
      %v525 = vsub.s32 %v522, %v524
      %v526 = vrot.slane %v512, %v525
      %v527 = vcombine.low %v471, %v487
      %v528 = vcombine.high %v471, %v487
      %v530 = vunpack.c.l.s4 1934713408
      %v531 = vunpack.c.0.s8 %v530
      %v532 = vlaneseq
      %v533 = vshrl.u32 %v532, 7
      %v534 = vsub.s32 %v531, %v533
      %v535 = vrot.slane %v527, %v534
      %v537 = vunpack.c.l.s4 1934713408
      %v538 = vunpack.c.0.s8 %v537
      %v539 = vlaneseq
      %v540 = vshrl.u32 %v539, 7
      %v541 = vsub.s32 %v538, %v540
      %v542 = vrot.slane %v528, %v541
      %v543 = vcombine.low %v478, %v494
      %v544 = vcombine.high %v478, %v494
      %v546 = vunpack.c.l.s4 1934713408
      %v547 = vunpack.c.0.s8 %v546
      %v548 = vlaneseq
      %v549 = vshrl.u32 %v548, 7
      %v550 = vsub.s32 %v547, %v549
      %v551 = vrot.slane %v543, %v550
      %v553 = vunpack.c.l.s4 1934713408
      %v554 = vunpack.c.0.s8 %v553
      %v555 = vlaneseq
      %v556 = vshrl.u32 %v555, 7
      %v557 = vsub.s32 %v554, %v556
      %v558 = vrot.slane %v544, %v557
      %v559 = vcombine.low %v503, %v535
      %v560 = vcombine.high %v503, %v535
      %v561 = vcombine.low %v510, %v542
      %v562 = vcombine.high %v510, %v542
      %v563 = vcombine.low %v519, %v551
      %v564 = vcombine.high %v519, %v551
      %v565 = vcombine.low %v526, %v558
      %v566 = vcombine.high %v526, %v558
      %v567 = vcombine.low %v201, %v228
      %v568 = vcombine.high %v201, %v228
      %v570 = vunpack.c.l.s4 1983009808
      %v571 = vunpack.c.0.s8 %v570
      %v572 = vlaneseq
      %v573 = vshrl.u32 %v572, 7
      %v574 = vsub.s32 %v571, %v573
      %v575 = vrot.slane %v567, %v574
      %v577 = vunpack.c.l.s4 1983009808
      %v578 = vunpack.c.0.s8 %v577
      %v579 = vlaneseq
      %v580 = vshrl.u32 %v579, 7
      %v581 = vsub.s32 %v578, %v580
      %v582 = vrot.slane %v568, %v581
      %v583 = vcombine.low %v216, %v240
      %v584 = vcombine.high %v216, %v240
      %v586 = vunpack.c.l.s4 1983009808
      %v587 = vunpack.c.0.s8 %v586
      %v588 = vlaneseq
      %v589 = vshrl.u32 %v588, 7
      %v590 = vsub.s32 %v587, %v589
      %v591 = vrot.slane %v583, %v590
      %v593 = vunpack.c.l.s4 1983009808
      %v594 = vunpack.c.0.s8 %v593
      %v595 = vlaneseq
      %v596 = vshrl.u32 %v595, 7
      %v597 = vsub.s32 %v594, %v596
      %v598 = vrot.slane %v584, %v597
      %v599 = vcombine.low %v252, %v276
      %v600 = vcombine.high %v252, %v276
      %v602 = vunpack.c.l.s4 1983009808
      %v603 = vunpack.c.0.s8 %v602
      %v604 = vlaneseq
      %v605 = vshrl.u32 %v604, 7
      %v606 = vsub.s32 %v603, %v605
      %v607 = vrot.slane %v599, %v606
      %v609 = vunpack.c.l.s4 1983009808
      %v610 = vunpack.c.0.s8 %v609
      %v611 = vlaneseq
      %v612 = vshrl.u32 %v611, 7
      %v613 = vsub.s32 %v610, %v612
      %v614 = vrot.slane %v600, %v613
      %v615 = vcombine.low %v264, %v288
      %v616 = vcombine.high %v264, %v288
      %v618 = vunpack.c.l.s4 1983009808
      %v619 = vunpack.c.0.s8 %v618
      %v620 = vlaneseq
      %v621 = vshrl.u32 %v620, 7
      %v622 = vsub.s32 %v619, %v621
      %v623 = vrot.slane %v615, %v622
      %v625 = vunpack.c.l.s4 1983009808
      %v626 = vunpack.c.0.s8 %v625
      %v627 = vlaneseq
      %v628 = vshrl.u32 %v627, 7
      %v629 = vsub.s32 %v626, %v628
      %v630 = vrot.slane %v616, %v629
      %v631 = vcombine.low %v575, %v591
      %v632 = vcombine.high %v575, %v591
      %v634 = vunpack.c.l.s4 1934713408
      %v635 = vunpack.c.0.s8 %v634
      %v636 = vlaneseq
      %v637 = vshrl.u32 %v636, 7
      %v638 = vsub.s32 %v635, %v637
      %v639 = vrot.slane %v631, %v638
      %v641 = vunpack.c.l.s4 1934713408
      %v642 = vunpack.c.0.s8 %v641
      %v643 = vlaneseq
      %v644 = vshrl.u32 %v643, 7
      %v645 = vsub.s32 %v642, %v644
      %v646 = vrot.slane %v632, %v645
      %v647 = vcombine.low %v582, %v598
      %v648 = vcombine.high %v582, %v598
      %v650 = vunpack.c.l.s4 1934713408
      %v651 = vunpack.c.0.s8 %v650
      %v652 = vlaneseq
      %v653 = vshrl.u32 %v652, 7
      %v654 = vsub.s32 %v651, %v653
      %v655 = vrot.slane %v647, %v654
      %v657 = vunpack.c.l.s4 1934713408
      %v658 = vunpack.c.0.s8 %v657
      %v659 = vlaneseq
      %v660 = vshrl.u32 %v659, 7
      %v661 = vsub.s32 %v658, %v660
      %v662 = vrot.slane %v648, %v661
      %v663 = vcombine.low %v607, %v623
      %v664 = vcombine.high %v607, %v623
      %v666 = vunpack.c.l.s4 1934713408
      %v667 = vunpack.c.0.s8 %v666
      %v668 = vlaneseq
      %v669 = vshrl.u32 %v668, 7
      %v670 = vsub.s32 %v667, %v669
      %v671 = vrot.slane %v663, %v670
      %v673 = vunpack.c.l.s4 1934713408
      %v674 = vunpack.c.0.s8 %v673
      %v675 = vlaneseq
      %v676 = vshrl.u32 %v675, 7
      %v677 = vsub.s32 %v674, %v676
      %v678 = vrot.slane %v664, %v677
      %v679 = vcombine.low %v614, %v630
      %v680 = vcombine.high %v614, %v630
      %v682 = vunpack.c.l.s4 1934713408
      %v683 = vunpack.c.0.s8 %v682
      %v684 = vlaneseq
      %v685 = vshrl.u32 %v684, 7
      %v686 = vsub.s32 %v683, %v685
      %v687 = vrot.slane %v679, %v686
      %v689 = vunpack.c.l.s4 1934713408
      %v690 = vunpack.c.0.s8 %v689
      %v691 = vlaneseq
      %v692 = vshrl.u32 %v691, 7
      %v693 = vsub.s32 %v690, %v692
      %v694 = vrot.slane %v680, %v693
      %v695 = vcombine.low %v639, %v671
      %v696 = vcombine.high %v639, %v671
      %v697 = vcombine.low %v646, %v678
      %v698 = vcombine.high %v646, %v678
      %v699 = vcombine.low %v655, %v687
      %v700 = vcombine.high %v655, %v687
      %v701 = vcombine.low %v662, %v694
      %v702 = vcombine.high %v662, %v694
      %v703 = vcombine.low %v202, %v230
      %v704 = vcombine.high %v202, %v230
      %v706 = vunpack.c.l.s4 1983009808
      %v707 = vunpack.c.0.s8 %v706
      %v708 = vlaneseq
      %v709 = vshrl.u32 %v708, 7
      %v710 = vsub.s32 %v707, %v709
      %v711 = vrot.slane %v703, %v710
      %v713 = vunpack.c.l.s4 1983009808
      %v714 = vunpack.c.0.s8 %v713
      %v715 = vlaneseq
      %v716 = vshrl.u32 %v715, 7
      %v717 = vsub.s32 %v714, %v716
      %v718 = vrot.slane %v704, %v717
      %v719 = vcombine.low %v218, %v242
      %v720 = vcombine.high %v218, %v242
      %v722 = vunpack.c.l.s4 1983009808
      %v723 = vunpack.c.0.s8 %v722
      %v724 = vlaneseq
      %v725 = vshrl.u32 %v724, 7
      %v726 = vsub.s32 %v723, %v725
      %v727 = vrot.slane %v719, %v726
      %v729 = vunpack.c.l.s4 1983009808
      %v730 = vunpack.c.0.s8 %v729
      %v731 = vlaneseq
      %v732 = vshrl.u32 %v731, 7
      %v733 = vsub.s32 %v730, %v732
      %v734 = vrot.slane %v720, %v733
      %v735 = vcombine.low %v254, %v278
      %v736 = vcombine.high %v254, %v278
      %v738 = vunpack.c.l.s4 1983009808
      %v739 = vunpack.c.0.s8 %v738
      %v740 = vlaneseq
      %v741 = vshrl.u32 %v740, 7
      %v742 = vsub.s32 %v739, %v741
      %v743 = vrot.slane %v735, %v742
      %v745 = vunpack.c.l.s4 1983009808
      %v746 = vunpack.c.0.s8 %v745
      %v747 = vlaneseq
      %v748 = vshrl.u32 %v747, 7
      %v749 = vsub.s32 %v746, %v748
      %v750 = vrot.slane %v736, %v749
      %v751 = vcombine.low %v266, %v290
      %v752 = vcombine.high %v266, %v290
      %v754 = vunpack.c.l.s4 1983009808
      %v755 = vunpack.c.0.s8 %v754
      %v756 = vlaneseq
      %v757 = vshrl.u32 %v756, 7
      %v758 = vsub.s32 %v755, %v757
      %v759 = vrot.slane %v751, %v758
      %v761 = vunpack.c.l.s4 1983009808
      %v762 = vunpack.c.0.s8 %v761
      %v763 = vlaneseq
      %v764 = vshrl.u32 %v763, 7
      %v765 = vsub.s32 %v762, %v764
      %v766 = vrot.slane %v752, %v765
      %v767 = vcombine.low %v711, %v727
      %v768 = vcombine.high %v711, %v727
      %v770 = vunpack.c.l.s4 1934713408
      %v771 = vunpack.c.0.s8 %v770
      %v772 = vlaneseq
      %v773 = vshrl.u32 %v772, 7
      %v774 = vsub.s32 %v771, %v773
      %v775 = vrot.slane %v767, %v774
      %v777 = vunpack.c.l.s4 1934713408
      %v778 = vunpack.c.0.s8 %v777
      %v779 = vlaneseq
      %v780 = vshrl.u32 %v779, 7
      %v781 = vsub.s32 %v778, %v780
      %v782 = vrot.slane %v768, %v781
      %v783 = vcombine.low %v718, %v734
      %v784 = vcombine.high %v718, %v734
      %v786 = vunpack.c.l.s4 1934713408
      %v787 = vunpack.c.0.s8 %v786
      %v788 = vlaneseq
      %v789 = vshrl.u32 %v788, 7
      %v790 = vsub.s32 %v787, %v789
      %v791 = vrot.slane %v783, %v790
      %v793 = vunpack.c.l.s4 1934713408
      %v794 = vunpack.c.0.s8 %v793
      %v795 = vlaneseq
      %v796 = vshrl.u32 %v795, 7
      %v797 = vsub.s32 %v794, %v796
      %v798 = vrot.slane %v784, %v797
      %v799 = vcombine.low %v743, %v759
      %v800 = vcombine.high %v743, %v759
      %v802 = vunpack.c.l.s4 1934713408
      %v803 = vunpack.c.0.s8 %v802
      %v804 = vlaneseq
      %v805 = vshrl.u32 %v804, 7
      %v806 = vsub.s32 %v803, %v805
      %v807 = vrot.slane %v799, %v806
      %v809 = vunpack.c.l.s4 1934713408
      %v810 = vunpack.c.0.s8 %v809
      %v811 = vlaneseq
      %v812 = vshrl.u32 %v811, 7
      %v813 = vsub.s32 %v810, %v812
      %v814 = vrot.slane %v800, %v813
      %v815 = vcombine.low %v750, %v766
      %v816 = vcombine.high %v750, %v766
      %v818 = vunpack.c.l.s4 1934713408
      %v819 = vunpack.c.0.s8 %v818
      %v820 = vlaneseq
      %v821 = vshrl.u32 %v820, 7
      %v822 = vsub.s32 %v819, %v821
      %v823 = vrot.slane %v815, %v822
      %v825 = vunpack.c.l.s4 1934713408
      %v826 = vunpack.c.0.s8 %v825
      %v827 = vlaneseq
      %v828 = vshrl.u32 %v827, 7
      %v829 = vsub.s32 %v826, %v828
      %v830 = vrot.slane %v816, %v829
      %v831 = vcombine.low %v775, %v807
      %v832 = vcombine.high %v775, %v807
      %v833 = vcombine.low %v782, %v814
      %v834 = vcombine.high %v782, %v814
      %v835 = vcombine.low %v791, %v823
      %v836 = vcombine.high %v791, %v823
      %v837 = vcombine.low %v798, %v830
      %v838 = vcombine.high %v798, %v830
      %843 = vrot.lane.b32.xlu0 %v203, 126
      %v844 = vpop.permute.xlu0 %843
      %845 = vrot.lane.b32.xlu0 %v204, 126
      %v846 = vpop.permute.xlu0 %845
      %847 = vrot.lane.b32.xlu0 %v205, 126
      %v848 = vpop.permute.xlu0 %847
      %849 = vrot.lane.b32.xlu0 %v206, 126
      %v850 = vpop.permute.xlu0 %849
      %855 = vrot.lane.b32.xlu0 %v203, 124
      %v856 = vpop.permute.xlu0 %855
      %857 = vrot.lane.b32.xlu0 %v204, 124
      %v858 = vpop.permute.xlu0 %857
      %859 = vrot.lane.b32.xlu0 %v205, 124
      %v860 = vpop.permute.xlu0 %859
      %861 = vrot.lane.b32.xlu0 %v206, 124
      %v862 = vpop.permute.xlu0 %861
      %867 = vrot.lane.b32.xlu0 %v203, 122
      %v868 = vpop.permute.xlu0 %867
      %869 = vrot.lane.b32.xlu0 %v204, 122
      %v870 = vpop.permute.xlu0 %869
      %871 = vrot.lane.b32.xlu0 %v205, 122
      %v872 = vpop.permute.xlu0 %871
      %873 = vrot.lane.b32.xlu0 %v206, 122
      %v874 = vpop.permute.xlu0 %873
      %879 = vrot.lane.b32.xlu0 %v203, 120
      %v880 = vpop.permute.xlu0 %879
      %881 = vrot.lane.b32.xlu0 %v204, 120
      %v882 = vpop.permute.xlu0 %881
      %883 = vrot.lane.b32.xlu0 %v205, 120
      %v884 = vpop.permute.xlu0 %883
      %885 = vrot.lane.b32.xlu0 %v206, 120
      %v886 = vpop.permute.xlu0 %885
      %891 = vrot.lane.b32.xlu0 %v203, 118
      %v892 = vpop.permute.xlu0 %891
      %893 = vrot.lane.b32.xlu0 %v204, 118
      %v894 = vpop.permute.xlu0 %893
      %895 = vrot.lane.b32.xlu0 %v205, 118
      %v896 = vpop.permute.xlu0 %895
      %897 = vrot.lane.b32.xlu0 %v206, 118
      %v898 = vpop.permute.xlu0 %897
      %903 = vrot.lane.b32.xlu0 %v203, 116
      %v904 = vpop.permute.xlu0 %903
      %905 = vrot.lane.b32.xlu0 %v204, 116
      %v906 = vpop.permute.xlu0 %905
      %907 = vrot.lane.b32.xlu0 %v205, 116
      %v908 = vpop.permute.xlu0 %907
      %909 = vrot.lane.b32.xlu0 %v206, 116
      %v910 = vpop.permute.xlu0 %909
      %915 = vrot.lane.b32.xlu0 %v203, 114
      %v916 = vpop.permute.xlu0 %915
      %917 = vrot.lane.b32.xlu0 %v204, 114
      %v918 = vpop.permute.xlu0 %917
      %919 = vrot.lane.b32.xlu0 %v205, 114
      %v920 = vpop.permute.xlu0 %919
      %921 = vrot.lane.b32.xlu0 %v206, 114
      %v922 = vpop.permute.xlu0 %921
      %v927 = vcombine.low %v203, %v856
      %v928 = vcombine.high %v203, %v856
      %v930 = vunpack.c.l.s4 1983009808
      %v931 = vunpack.c.0.s8 %v930
      %v932 = vlaneseq
      %v933 = vshrl.u32 %v932, 7
      %v934 = vsub.s32 %v931, %v933
      %v935 = vrot.slane %v927, %v934
      %v937 = vunpack.c.l.s4 1983009808
      %v938 = vunpack.c.0.s8 %v937
      %v939 = vlaneseq
      %v940 = vshrl.u32 %v939, 7
      %v941 = vsub.s32 %v938, %v940
      %v942 = vrot.slane %v928, %v941
      %v943 = vcombine.low %v844, %v868
      %v944 = vcombine.high %v844, %v868
      %v946 = vunpack.c.l.s4 1983009808
      %v947 = vunpack.c.0.s8 %v946
      %v948 = vlaneseq
      %v949 = vshrl.u32 %v948, 7
      %v950 = vsub.s32 %v947, %v949
      %v951 = vrot.slane %v943, %v950
      %v953 = vunpack.c.l.s4 1983009808
      %v954 = vunpack.c.0.s8 %v953
      %v955 = vlaneseq
      %v956 = vshrl.u32 %v955, 7
      %v957 = vsub.s32 %v954, %v956
      %v958 = vrot.slane %v944, %v957
      %v959 = vcombine.low %v880, %v904
      %v960 = vcombine.high %v880, %v904
      %v962 = vunpack.c.l.s4 1983009808
      %v963 = vunpack.c.0.s8 %v962
      %v964 = vlaneseq
      %v965 = vshrl.u32 %v964, 7
      %v966 = vsub.s32 %v963, %v965
      %v967 = vrot.slane %v959, %v966
      %v969 = vunpack.c.l.s4 1983009808
      %v970 = vunpack.c.0.s8 %v969
      %v971 = vlaneseq
      %v972 = vshrl.u32 %v971, 7
      %v973 = vsub.s32 %v970, %v972
      %v974 = vrot.slane %v960, %v973
      %v975 = vcombine.low %v892, %v916
      %v976 = vcombine.high %v892, %v916
      %v978 = vunpack.c.l.s4 1983009808
      %v979 = vunpack.c.0.s8 %v978
      %v980 = vlaneseq
      %v981 = vshrl.u32 %v980, 7
      %v982 = vsub.s32 %v979, %v981
      %v983 = vrot.slane %v975, %v982
      %v985 = vunpack.c.l.s4 1983009808
      %v986 = vunpack.c.0.s8 %v985
      %v987 = vlaneseq
      %v988 = vshrl.u32 %v987, 7
      %v989 = vsub.s32 %v986, %v988
      %v990 = vrot.slane %v976, %v989
      %v991 = vcombine.low %v935, %v951
      %v992 = vcombine.high %v935, %v951
      %v994 = vunpack.c.l.s4 1934713408
      %v995 = vunpack.c.0.s8 %v994
      %v996 = vlaneseq
      %v997 = vshrl.u32 %v996, 7
      %v998 = vsub.s32 %v995, %v997
      %v999 = vrot.slane %v991, %v998
      %v1001 = vunpack.c.l.s4 1934713408
      %v1002 = vunpack.c.0.s8 %v1001
      %v1003 = vlaneseq
      %v1004 = vshrl.u32 %v1003, 7
      %v1005 = vsub.s32 %v1002, %v1004
      %v1006 = vrot.slane %v992, %v1005
      %v1007 = vcombine.low %v942, %v958
      %v1008 = vcombine.high %v942, %v958
      %v1010 = vunpack.c.l.s4 1934713408
      %v1011 = vunpack.c.0.s8 %v1010
      %v1012 = vlaneseq
      %v1013 = vshrl.u32 %v1012, 7
      %v1014 = vsub.s32 %v1011, %v1013
      %v1015 = vrot.slane %v1007, %v1014
      %v1017 = vunpack.c.l.s4 1934713408
      %v1018 = vunpack.c.0.s8 %v1017
      %v1019 = vlaneseq
      %v1020 = vshrl.u32 %v1019, 7
      %v1021 = vsub.s32 %v1018, %v1020
      %v1022 = vrot.slane %v1008, %v1021
      %v1023 = vcombine.low %v967, %v983
      %v1024 = vcombine.high %v967, %v983
      %v1026 = vunpack.c.l.s4 1934713408
      %v1027 = vunpack.c.0.s8 %v1026
      %v1028 = vlaneseq
      %v1029 = vshrl.u32 %v1028, 7
      %v1030 = vsub.s32 %v1027, %v1029
      %v1031 = vrot.slane %v1023, %v1030
      %v1033 = vunpack.c.l.s4 1934713408
      %v1034 = vunpack.c.0.s8 %v1033
      %v1035 = vlaneseq
      %v1036 = vshrl.u32 %v1035, 7
      %v1037 = vsub.s32 %v1034, %v1036
      %v1038 = vrot.slane %v1024, %v1037
      %v1039 = vcombine.low %v974, %v990
      %v1040 = vcombine.high %v974, %v990
      %v1042 = vunpack.c.l.s4 1934713408
      %v1043 = vunpack.c.0.s8 %v1042
      %v1044 = vlaneseq
      %v1045 = vshrl.u32 %v1044, 7
      %v1046 = vsub.s32 %v1043, %v1045
      %v1047 = vrot.slane %v1039, %v1046
      %v1049 = vunpack.c.l.s4 1934713408
      %v1050 = vunpack.c.0.s8 %v1049
      %v1051 = vlaneseq
      %v1052 = vshrl.u32 %v1051, 7
      %v1053 = vsub.s32 %v1050, %v1052
      %v1054 = vrot.slane %v1040, %v1053
      %v1055 = vcombine.low %v999, %v1031
      %v1056 = vcombine.high %v999, %v1031
      %v1057 = vcombine.low %v1006, %v1038
      %v1058 = vcombine.high %v1006, %v1038
      %v1059 = vcombine.low %v1015, %v1047
      %v1060 = vcombine.high %v1015, %v1047
      %v1061 = vcombine.low %v1022, %v1054
      %v1062 = vcombine.high %v1022, %v1054
      %v1063 = vcombine.low %v204, %v858
      %v1064 = vcombine.high %v204, %v858
      %v1066 = vunpack.c.l.s4 1983009808
      %v1067 = vunpack.c.0.s8 %v1066
      %v1068 = vlaneseq
      %v1069 = vshrl.u32 %v1068, 7
      %v1070 = vsub.s32 %v1067, %v1069
      %v1071 = vrot.slane %v1063, %v1070
      %v1073 = vunpack.c.l.s4 1983009808
      %v1074 = vunpack.c.0.s8 %v1073
      %v1075 = vlaneseq
      %v1076 = vshrl.u32 %v1075, 7
      %v1077 = vsub.s32 %v1074, %v1076
      %v1078 = vrot.slane %v1064, %v1077
      %v1079 = vcombine.low %v846, %v870
      %v1080 = vcombine.high %v846, %v870
      %v1082 = vunpack.c.l.s4 1983009808
      %v1083 = vunpack.c.0.s8 %v1082
      %v1084 = vlaneseq
      %v1085 = vshrl.u32 %v1084, 7
      %v1086 = vsub.s32 %v1083, %v1085
      %v1087 = vrot.slane %v1079, %v1086
      %v1089 = vunpack.c.l.s4 1983009808
      %v1090 = vunpack.c.0.s8 %v1089
      %v1091 = vlaneseq
      %v1092 = vshrl.u32 %v1091, 7
      %v1093 = vsub.s32 %v1090, %v1092
      %v1094 = vrot.slane %v1080, %v1093
      %v1095 = vcombine.low %v882, %v906
      %v1096 = vcombine.high %v882, %v906
      %v1098 = vunpack.c.l.s4 1983009808
      %v1099 = vunpack.c.0.s8 %v1098
      %v1100 = vlaneseq
      %v1101 = vshrl.u32 %v1100, 7
      %v1102 = vsub.s32 %v1099, %v1101
      %v1103 = vrot.slane %v1095, %v1102
      %v1105 = vunpack.c.l.s4 1983009808
      %v1106 = vunpack.c.0.s8 %v1105
      %v1107 = vlaneseq
      %v1108 = vshrl.u32 %v1107, 7
      %v1109 = vsub.s32 %v1106, %v1108
      %v1110 = vrot.slane %v1096, %v1109
      %v1111 = vcombine.low %v894, %v918
      %v1112 = vcombine.high %v894, %v918
      %v1114 = vunpack.c.l.s4 1983009808
      %v1115 = vunpack.c.0.s8 %v1114
      %v1116 = vlaneseq
      %v1117 = vshrl.u32 %v1116, 7
      %v1118 = vsub.s32 %v1115, %v1117
      %v1119 = vrot.slane %v1111, %v1118
      %v1121 = vunpack.c.l.s4 1983009808
      %v1122 = vunpack.c.0.s8 %v1121
      %v1123 = vlaneseq
      %v1124 = vshrl.u32 %v1123, 7
      %v1125 = vsub.s32 %v1122, %v1124
      %v1126 = vrot.slane %v1112, %v1125
      %v1127 = vcombine.low %v1071, %v1087
      %v1128 = vcombine.high %v1071, %v1087
      %v1130 = vunpack.c.l.s4 1934713408
      %v1131 = vunpack.c.0.s8 %v1130
      %v1132 = vlaneseq
      %v1133 = vshrl.u32 %v1132, 7
      %v1134 = vsub.s32 %v1131, %v1133
      %v1135 = vrot.slane %v1127, %v1134
      %v1137 = vunpack.c.l.s4 1934713408
      %v1138 = vunpack.c.0.s8 %v1137
      %v1139 = vlaneseq
      %v1140 = vshrl.u32 %v1139, 7
      %v1141 = vsub.s32 %v1138, %v1140
      %v1142 = vrot.slane %v1128, %v1141
      %v1143 = vcombine.low %v1078, %v1094
      %v1144 = vcombine.high %v1078, %v1094
      %v1146 = vunpack.c.l.s4 1934713408
      %v1147 = vunpack.c.0.s8 %v1146
      %v1148 = vlaneseq
      %v1149 = vshrl.u32 %v1148, 7
      %v1150 = vsub.s32 %v1147, %v1149
      %v1151 = vrot.slane %v1143, %v1150
      %v1153 = vunpack.c.l.s4 1934713408
      %v1154 = vunpack.c.0.s8 %v1153
      %v1155 = vlaneseq
      %v1156 = vshrl.u32 %v1155, 7
      %v1157 = vsub.s32 %v1154, %v1156
      %v1158 = vrot.slane %v1144, %v1157
      %v1159 = vcombine.low %v1103, %v1119
      %v1160 = vcombine.high %v1103, %v1119
      %v1162 = vunpack.c.l.s4 1934713408
      %v1163 = vunpack.c.0.s8 %v1162
      %v1164 = vlaneseq
      %v1165 = vshrl.u32 %v1164, 7
      %v1166 = vsub.s32 %v1163, %v1165
      %v1167 = vrot.slane %v1159, %v1166
      %v1169 = vunpack.c.l.s4 1934713408
      %v1170 = vunpack.c.0.s8 %v1169
      %v1171 = vlaneseq
      %v1172 = vshrl.u32 %v1171, 7
      %v1173 = vsub.s32 %v1170, %v1172
      %v1174 = vrot.slane %v1160, %v1173
      %v1175 = vcombine.low %v1110, %v1126
      %v1176 = vcombine.high %v1110, %v1126
      %v1178 = vunpack.c.l.s4 1934713408
      %v1179 = vunpack.c.0.s8 %v1178
      %v1180 = vlaneseq
      %v1181 = vshrl.u32 %v1180, 7
      %v1182 = vsub.s32 %v1179, %v1181
      %v1183 = vrot.slane %v1175, %v1182
      %v1185 = vunpack.c.l.s4 1934713408
      %v1186 = vunpack.c.0.s8 %v1185
      %v1187 = vlaneseq
      %v1188 = vshrl.u32 %v1187, 7
      %v1189 = vsub.s32 %v1186, %v1188
      %v1190 = vrot.slane %v1176, %v1189
      %v1191 = vcombine.low %v1135, %v1167
      %v1192 = vcombine.high %v1135, %v1167
      %v1193 = vcombine.low %v1142, %v1174
      %v1194 = vcombine.high %v1142, %v1174
      %v1195 = vcombine.low %v1151, %v1183
      %v1196 = vcombine.high %v1151, %v1183
      %v1197 = vcombine.low %v1158, %v1190
      %v1198 = vcombine.high %v1158, %v1190
      %v1199 = vcombine.low %v205, %v860
      %v1200 = vcombine.high %v205, %v860
      %v1202 = vunpack.c.l.s4 1983009808
      %v1203 = vunpack.c.0.s8 %v1202
      %v1204 = vlaneseq
      %v1205 = vshrl.u32 %v1204, 7
      %v1206 = vsub.s32 %v1203, %v1205
      %v1207 = vrot.slane %v1199, %v1206
      %v1209 = vunpack.c.l.s4 1983009808
      %v1210 = vunpack.c.0.s8 %v1209
      %v1211 = vlaneseq
      %v1212 = vshrl.u32 %v1211, 7
      %v1213 = vsub.s32 %v1210, %v1212
      %v1214 = vrot.slane %v1200, %v1213
      %v1215 = vcombine.low %v848, %v872
      %v1216 = vcombine.high %v848, %v872
      %v1218 = vunpack.c.l.s4 1983009808
      %v1219 = vunpack.c.0.s8 %v1218
      %v1220 = vlaneseq
      %v1221 = vshrl.u32 %v1220, 7
      %v1222 = vsub.s32 %v1219, %v1221
      %v1223 = vrot.slane %v1215, %v1222
      %v1225 = vunpack.c.l.s4 1983009808
      %v1226 = vunpack.c.0.s8 %v1225
      %v1227 = vlaneseq
      %v1228 = vshrl.u32 %v1227, 7
      %v1229 = vsub.s32 %v1226, %v1228
      %v1230 = vrot.slane %v1216, %v1229
      %v1231 = vcombine.low %v884, %v908
      %v1232 = vcombine.high %v884, %v908
      %v1234 = vunpack.c.l.s4 1983009808
      %v1235 = vunpack.c.0.s8 %v1234
      %v1236 = vlaneseq
      %v1237 = vshrl.u32 %v1236, 7
      %v1238 = vsub.s32 %v1235, %v1237
      %v1239 = vrot.slane %v1231, %v1238
      %v1241 = vunpack.c.l.s4 1983009808
      %v1242 = vunpack.c.0.s8 %v1241
      %v1243 = vlaneseq
      %v1244 = vshrl.u32 %v1243, 7
      %v1245 = vsub.s32 %v1242, %v1244
      %v1246 = vrot.slane %v1232, %v1245
      %v1247 = vcombine.low %v896, %v920
      %v1248 = vcombine.high %v896, %v920
      %v1250 = vunpack.c.l.s4 1983009808
      %v1251 = vunpack.c.0.s8 %v1250
      %v1252 = vlaneseq
      %v1253 = vshrl.u32 %v1252, 7
      %v1254 = vsub.s32 %v1251, %v1253
      %v1255 = vrot.slane %v1247, %v1254
      %v1257 = vunpack.c.l.s4 1983009808
      %v1258 = vunpack.c.0.s8 %v1257
      %v1259 = vlaneseq
      %v1260 = vshrl.u32 %v1259, 7
      %v1261 = vsub.s32 %v1258, %v1260
      %v1262 = vrot.slane %v1248, %v1261
      %v1263 = vcombine.low %v1207, %v1223
      %v1264 = vcombine.high %v1207, %v1223
      %v1266 = vunpack.c.l.s4 1934713408
      %v1267 = vunpack.c.0.s8 %v1266
      %v1268 = vlaneseq
      %v1269 = vshrl.u32 %v1268, 7
      %v1270 = vsub.s32 %v1267, %v1269
      %v1271 = vrot.slane %v1263, %v1270
      %v1273 = vunpack.c.l.s4 1934713408
      %v1274 = vunpack.c.0.s8 %v1273
      %v1275 = vlaneseq
      %v1276 = vshrl.u32 %v1275, 7
      %v1277 = vsub.s32 %v1274, %v1276
      %v1278 = vrot.slane %v1264, %v1277
      %v1279 = vcombine.low %v1214, %v1230
      %v1280 = vcombine.high %v1214, %v1230
      %v1282 = vunpack.c.l.s4 1934713408
      %v1283 = vunpack.c.0.s8 %v1282
      %v1284 = vlaneseq
      %v1285 = vshrl.u32 %v1284, 7
      %v1286 = vsub.s32 %v1283, %v1285
      %v1287 = vrot.slane %v1279, %v1286
      %v1289 = vunpack.c.l.s4 1934713408
      %v1290 = vunpack.c.0.s8 %v1289
      %v1291 = vlaneseq
      %v1292 = vshrl.u32 %v1291, 7
      %v1293 = vsub.s32 %v1290, %v1292
      %v1294 = vrot.slane %v1280, %v1293
      %v1295 = vcombine.low %v1239, %v1255
      %v1296 = vcombine.high %v1239, %v1255
      %v1298 = vunpack.c.l.s4 1934713408
      %v1299 = vunpack.c.0.s8 %v1298
      %v1300 = vlaneseq
      %v1301 = vshrl.u32 %v1300, 7
      %v1302 = vsub.s32 %v1299, %v1301
      %v1303 = vrot.slane %v1295, %v1302
      %v1305 = vunpack.c.l.s4 1934713408
      %v1306 = vunpack.c.0.s8 %v1305
      %v1307 = vlaneseq
      %v1308 = vshrl.u32 %v1307, 7
      %v1309 = vsub.s32 %v1306, %v1308
      %v1310 = vrot.slane %v1296, %v1309
      %v1311 = vcombine.low %v1246, %v1262
      %v1312 = vcombine.high %v1246, %v1262
      %v1314 = vunpack.c.l.s4 1934713408
      %v1315 = vunpack.c.0.s8 %v1314
      %v1316 = vlaneseq
      %v1317 = vshrl.u32 %v1316, 7
      %v1318 = vsub.s32 %v1315, %v1317
      %v1319 = vrot.slane %v1311, %v1318
      %v1321 = vunpack.c.l.s4 1934713408
      %v1322 = vunpack.c.0.s8 %v1321
      %v1323 = vlaneseq
      %v1324 = vshrl.u32 %v1323, 7
      %v1325 = vsub.s32 %v1322, %v1324
      %v1326 = vrot.slane %v1312, %v1325
      %v1327 = vcombine.low %v1271, %v1303
      %v1328 = vcombine.high %v1271, %v1303
      %v1329 = vcombine.low %v1278, %v1310
      %v1330 = vcombine.high %v1278, %v1310
      %v1331 = vcombine.low %v1287, %v1319
      %v1332 = vcombine.high %v1287, %v1319
      %v1333 = vcombine.low %v1294, %v1326
      %v1334 = vcombine.high %v1294, %v1326
      %v1335 = vcombine.low %v206, %v862
      %v1336 = vcombine.high %v206, %v862
      %v1338 = vunpack.c.l.s4 1983009808
      %v1339 = vunpack.c.0.s8 %v1338
      %v1340 = vlaneseq
      %v1341 = vshrl.u32 %v1340, 7
      %v1342 = vsub.s32 %v1339, %v1341
      %v1343 = vrot.slane %v1335, %v1342
      %v1345 = vunpack.c.l.s4 1983009808
      %v1346 = vunpack.c.0.s8 %v1345
      %v1347 = vlaneseq
      %v1348 = vshrl.u32 %v1347, 7
      %v1349 = vsub.s32 %v1346, %v1348
      %v1350 = vrot.slane %v1336, %v1349
      %v1351 = vcombine.low %v850, %v874
      %v1352 = vcombine.high %v850, %v874
      %v1354 = vunpack.c.l.s4 1983009808
      %v1355 = vunpack.c.0.s8 %v1354
      %v1356 = vlaneseq
      %v1357 = vshrl.u32 %v1356, 7
      %v1358 = vsub.s32 %v1355, %v1357
      %v1359 = vrot.slane %v1351, %v1358
      %v1361 = vunpack.c.l.s4 1983009808
      %v1362 = vunpack.c.0.s8 %v1361
      %v1363 = vlaneseq
      %v1364 = vshrl.u32 %v1363, 7
      %v1365 = vsub.s32 %v1362, %v1364
      %v1366 = vrot.slane %v1352, %v1365
      %v1367 = vcombine.low %v886, %v910
      %v1368 = vcombine.high %v886, %v910
      %v1370 = vunpack.c.l.s4 1983009808
      %v1371 = vunpack.c.0.s8 %v1370
      %v1372 = vlaneseq
      %v1373 = vshrl.u32 %v1372, 7
      %v1374 = vsub.s32 %v1371, %v1373
      %v1375 = vrot.slane %v1367, %v1374
      %v1377 = vunpack.c.l.s4 1983009808
      %v1378 = vunpack.c.0.s8 %v1377
      %v1379 = vlaneseq
      %v1380 = vshrl.u32 %v1379, 7
      %v1381 = vsub.s32 %v1378, %v1380
      %v1382 = vrot.slane %v1368, %v1381
      %v1383 = vcombine.low %v898, %v922
      %v1384 = vcombine.high %v898, %v922
      %v1386 = vunpack.c.l.s4 1983009808
      %v1387 = vunpack.c.0.s8 %v1386
      %v1388 = vlaneseq
      %v1389 = vshrl.u32 %v1388, 7
      %v1390 = vsub.s32 %v1387, %v1389
      %v1391 = vrot.slane %v1383, %v1390
      %v1393 = vunpack.c.l.s4 1983009808
      %v1394 = vunpack.c.0.s8 %v1393
      %v1395 = vlaneseq
      %v1396 = vshrl.u32 %v1395, 7
      %v1397 = vsub.s32 %v1394, %v1396
      %v1398 = vrot.slane %v1384, %v1397
      %v1399 = vcombine.low %v1343, %v1359
      %v1400 = vcombine.high %v1343, %v1359
      %v1402 = vunpack.c.l.s4 1934713408
      %v1403 = vunpack.c.0.s8 %v1402
      %v1404 = vlaneseq
      %v1405 = vshrl.u32 %v1404, 7
      %v1406 = vsub.s32 %v1403, %v1405
      %v1407 = vrot.slane %v1399, %v1406
      %v1409 = vunpack.c.l.s4 1934713408
      %v1410 = vunpack.c.0.s8 %v1409
      %v1411 = vlaneseq
      %v1412 = vshrl.u32 %v1411, 7
      %v1413 = vsub.s32 %v1410, %v1412
      %v1414 = vrot.slane %v1400, %v1413
      %v1415 = vcombine.low %v1350, %v1366
      %v1416 = vcombine.high %v1350, %v1366
      %v1418 = vunpack.c.l.s4 1934713408
      %v1419 = vunpack.c.0.s8 %v1418
      %v1420 = vlaneseq
      %v1421 = vshrl.u32 %v1420, 7
      %v1422 = vsub.s32 %v1419, %v1421
      %v1423 = vrot.slane %v1415, %v1422
      %v1425 = vunpack.c.l.s4 1934713408
      %v1426 = vunpack.c.0.s8 %v1425
      %v1427 = vlaneseq
      %v1428 = vshrl.u32 %v1427, 7
      %v1429 = vsub.s32 %v1426, %v1428
      %v1430 = vrot.slane %v1416, %v1429
      %v1431 = vcombine.low %v1375, %v1391
      %v1432 = vcombine.high %v1375, %v1391
      %v1434 = vunpack.c.l.s4 1934713408
      %v1435 = vunpack.c.0.s8 %v1434
      %v1436 = vlaneseq
      %v1437 = vshrl.u32 %v1436, 7
      %v1438 = vsub.s32 %v1435, %v1437
      %v1439 = vrot.slane %v1431, %v1438
      %v1441 = vunpack.c.l.s4 1934713408
      %v1442 = vunpack.c.0.s8 %v1441
      %v1443 = vlaneseq
      %v1444 = vshrl.u32 %v1443, 7
      %v1445 = vsub.s32 %v1442, %v1444
      %v1446 = vrot.slane %v1432, %v1445
      %v1447 = vcombine.low %v1382, %v1398
      %v1448 = vcombine.high %v1382, %v1398
      %v1450 = vunpack.c.l.s4 1934713408
      %v1451 = vunpack.c.0.s8 %v1450
      %v1452 = vlaneseq
      %v1453 = vshrl.u32 %v1452, 7
      %v1454 = vsub.s32 %v1451, %v1453
      %v1455 = vrot.slane %v1447, %v1454
      %v1457 = vunpack.c.l.s4 1934713408
      %v1458 = vunpack.c.0.s8 %v1457
      %v1459 = vlaneseq
      %v1460 = vshrl.u32 %v1459, 7
      %v1461 = vsub.s32 %v1458, %v1460
      %v1462 = vrot.slane %v1448, %v1461
      %v1463 = vcombine.low %v1407, %v1439
      %v1464 = vcombine.high %v1407, %v1439
      %v1465 = vcombine.low %v1414, %v1446
      %v1466 = vcombine.high %v1414, %v1446
      %v1467 = vcombine.low %v1423, %v1455
      %v1468 = vcombine.high %v1423, %v1455
      %v1469 = vcombine.low %v1430, %v1462
      %v1470 = vcombine.high %v1430, %v1462
      %1503 = vrot.lane.b32.xlu0 %v423, 127
      %v1504 = vpop.permute.xlu0 %1503
      %1505 = vrot.lane.b32.xlu0 %v424, 127
      %v1506 = vpop.permute.xlu0 %1505
      %1507 = vrot.lane.b32.xlu0 %v425, 127
      %v1508 = vpop.permute.xlu0 %1507
      %1509 = vrot.lane.b32.xlu0 %v426, 127
      %v1510 = vpop.permute.xlu0 %1509
      %1511 = vrot.lane.b32.xlu0 %v427, 127
      %v1512 = vpop.permute.xlu0 %1511
      %1513 = vrot.lane.b32.xlu0 %v428, 127
      %v1514 = vpop.permute.xlu0 %1513
      %1515 = vrot.lane.b32.xlu0 %v429, 127
      %v1516 = vpop.permute.xlu0 %1515
      %1517 = vrot.lane.b32.xlu0 %v430, 127
      %v1518 = vpop.permute.xlu0 %1517
      %1519 = vrot.lane.b32.xlu0 %v559, 127
      %v1520 = vpop.permute.xlu0 %1519
      %1521 = vrot.lane.b32.xlu0 %v560, 127
      %v1522 = vpop.permute.xlu0 %1521
      %1523 = vrot.lane.b32.xlu0 %v561, 127
      %v1524 = vpop.permute.xlu0 %1523
      %1525 = vrot.lane.b32.xlu0 %v562, 127
      %v1526 = vpop.permute.xlu0 %1525
      %1527 = vrot.lane.b32.xlu0 %v563, 127
      %v1528 = vpop.permute.xlu0 %1527
      %1529 = vrot.lane.b32.xlu0 %v564, 127
      %v1530 = vpop.permute.xlu0 %1529
      %1531 = vrot.lane.b32.xlu0 %v565, 127
      %v1532 = vpop.permute.xlu0 %1531
      %1533 = vrot.lane.b32.xlu0 %v566, 127
      %v1534 = vpop.permute.xlu0 %1533
      %1535 = vrot.lane.b32.xlu0 %v695, 127
      %v1536 = vpop.permute.xlu0 %1535
      %1537 = vrot.lane.b32.xlu0 %v696, 127
      %v1538 = vpop.permute.xlu0 %1537
      %1539 = vrot.lane.b32.xlu0 %v697, 127
      %v1540 = vpop.permute.xlu0 %1539
      %1541 = vrot.lane.b32.xlu0 %v698, 127
      %v1542 = vpop.permute.xlu0 %1541
      %1543 = vrot.lane.b32.xlu0 %v699, 127
      %v1544 = vpop.permute.xlu0 %1543
      %1545 = vrot.lane.b32.xlu0 %v700, 127
      %v1546 = vpop.permute.xlu0 %1545
      %1547 = vrot.lane.b32.xlu0 %v701, 127
      %v1548 = vpop.permute.xlu0 %1547
      %1549 = vrot.lane.b32.xlu0 %v702, 127
      %v1550 = vpop.permute.xlu0 %1549
      %1551 = vrot.lane.b32.xlu0 %v831, 127
      %v1552 = vpop.permute.xlu0 %1551
      %1553 = vrot.lane.b32.xlu0 %v832, 127
      %v1554 = vpop.permute.xlu0 %1553
      %1555 = vrot.lane.b32.xlu0 %v833, 127
      %v1556 = vpop.permute.xlu0 %1555
      %1557 = vrot.lane.b32.xlu0 %v834, 127
      %v1558 = vpop.permute.xlu0 %1557
      %1559 = vrot.lane.b32.xlu0 %v835, 127
      %v1560 = vpop.permute.xlu0 %1559
      %1561 = vrot.lane.b32.xlu0 %v836, 127
      %v1562 = vpop.permute.xlu0 %1561
      %1563 = vrot.lane.b32.xlu0 %v837, 127
      %v1564 = vpop.permute.xlu0 %1563
      %1565 = vrot.lane.b32.xlu0 %v838, 127
      %v1566 = vpop.permute.xlu0 %1565
      %v1599 = vadd.f32 %v423, %v1504
      %v1600 = vadd.f32 %v424, %v1506
      %v1601 = vadd.f32 %v425, %v1508
      %v1602 = vadd.f32 %v426, %v1510
      %v1603 = vadd.f32 %v427, %v1512
      %v1604 = vadd.f32 %v428, %v1514
      %v1605 = vadd.f32 %v429, %v1516
      %v1606 = vadd.f32 %v430, %v1518
      %v1607 = vadd.f32 %v559, %v1520
      %v1608 = vadd.f32 %v560, %v1522
      %v1609 = vadd.f32 %v561, %v1524
      %v1610 = vadd.f32 %v562, %v1526
      %v1611 = vadd.f32 %v563, %v1528
      %v1612 = vadd.f32 %v564, %v1530
      %v1613 = vadd.f32 %v565, %v1532
      %v1614 = vadd.f32 %v566, %v1534
      %v1615 = vadd.f32 %v695, %v1536
      %v1616 = vadd.f32 %v696, %v1538
      %v1617 = vadd.f32 %v697, %v1540
      %v1618 = vadd.f32 %v698, %v1542
      %v1619 = vadd.f32 %v699, %v1544
      %v1620 = vadd.f32 %v700, %v1546
      %v1621 = vadd.f32 %v701, %v1548
      %v1622 = vadd.f32 %v702, %v1550
      %v1623 = vadd.f32 %v831, %v1552
      %v1624 = vadd.f32 %v832, %v1554
      %v1625 = vadd.f32 %v833, %v1556
      %v1626 = vadd.f32 %v834, %v1558
      %v1627 = vadd.f32 %v835, %v1560
      %v1628 = vadd.f32 %v836, %v1562
      %v1629 = vadd.f32 %v837, %v1564
      %v1630 = vadd.f32 %v838, %v1566
      %v1631 = vmul.f32 %v1599, 0.25
      %v1632 = vmul.f32 %v1600, 0.25
      %v1633 = vmul.f32 %v1601, 0.25
      %v1634 = vmul.f32 %v1602, 0.25
      %v1635 = vmul.f32 %v1603, 0.25
      %v1636 = vmul.f32 %v1604, 0.25
      %v1637 = vmul.f32 %v1605, 0.25
      %v1638 = vmul.f32 %v1606, 0.25
      %v1639 = vmul.f32 %v1607, 0.25
      %v1640 = vmul.f32 %v1608, 0.25
      %v1641 = vmul.f32 %v1609, 0.25
      %v1642 = vmul.f32 %v1610, 0.25
      %v1643 = vmul.f32 %v1611, 0.25
      %v1644 = vmul.f32 %v1612, 0.25
      %v1645 = vmul.f32 %v1613, 0.25
      %v1646 = vmul.f32 %v1614, 0.25
      %v1647 = vmul.f32 %v1615, 0.25
      %v1648 = vmul.f32 %v1616, 0.25
      %v1649 = vmul.f32 %v1617, 0.25
      %v1650 = vmul.f32 %v1618, 0.25
      %v1651 = vmul.f32 %v1619, 0.25
      %v1652 = vmul.f32 %v1620, 0.25
      %v1653 = vmul.f32 %v1621, 0.25
      %v1654 = vmul.f32 %v1622, 0.25
      %v1655 = vmul.f32 %v1623, 0.25
      %v1656 = vmul.f32 %v1624, 0.25
      %v1657 = vmul.f32 %v1625, 0.25
      %v1658 = vmul.f32 %v1626, 0.25
      %v1659 = vmul.f32 %v1627, 0.25
      %v1660 = vmul.f32 %v1628, 0.25
      %v1661 = vmul.f32 %v1629, 0.25
      %v1662 = vmul.f32 %v1630, 0.25
      %1695 = vset.pattern.permute.xlu0 0
      %1696 = vperm.xlu0 %1695, %v1631
      %v1697 = vpop.permute.xlu0 %1696
      %1698 = vset.pattern.permute.xlu0 0
      %1699 = vperm.xlu0 %1698, %v1632
      %v1700 = vpop.permute.xlu0 %1699
      %1701 = vset.pattern.permute.xlu0 0
      %1702 = vperm.xlu0 %1701, %v1633
      %v1703 = vpop.permute.xlu0 %1702
      %1704 = vset.pattern.permute.xlu0 0
      %1705 = vperm.xlu0 %1704, %v1634
      %v1706 = vpop.permute.xlu0 %1705
      %1707 = vset.pattern.permute.xlu0 0
      %1708 = vperm.xlu0 %1707, %v1635
      %v1709 = vpop.permute.xlu0 %1708
      %1710 = vset.pattern.permute.xlu0 0
      %1711 = vperm.xlu0 %1710, %v1636
      %v1712 = vpop.permute.xlu0 %1711
      %1713 = vset.pattern.permute.xlu0 0
      %1714 = vperm.xlu0 %1713, %v1637
      %v1715 = vpop.permute.xlu0 %1714
      %1716 = vset.pattern.permute.xlu0 0
      %1717 = vperm.xlu0 %1716, %v1638
      %v1718 = vpop.permute.xlu0 %1717
      %1719 = vset.pattern.permute.xlu0 0
      %1720 = vperm.xlu0 %1719, %v1639
      %v1721 = vpop.permute.xlu0 %1720
      %1722 = vset.pattern.permute.xlu0 0
      %1723 = vperm.xlu0 %1722, %v1640
      %v1724 = vpop.permute.xlu0 %1723
      %1725 = vset.pattern.permute.xlu0 0
      %1726 = vperm.xlu0 %1725, %v1641
      %v1727 = vpop.permute.xlu0 %1726
      %1728 = vset.pattern.permute.xlu0 0
      %1729 = vperm.xlu0 %1728, %v1642
      %v1730 = vpop.permute.xlu0 %1729
      %1731 = vset.pattern.permute.xlu0 0
      %1732 = vperm.xlu0 %1731, %v1643
      %v1733 = vpop.permute.xlu0 %1732
      %1734 = vset.pattern.permute.xlu0 0
      %1735 = vperm.xlu0 %1734, %v1644
      %v1736 = vpop.permute.xlu0 %1735
      %1737 = vset.pattern.permute.xlu0 0
      %1738 = vperm.xlu0 %1737, %v1645
      %v1739 = vpop.permute.xlu0 %1738
      %1740 = vset.pattern.permute.xlu0 0
      %1741 = vperm.xlu0 %1740, %v1646
      %v1742 = vpop.permute.xlu0 %1741
      %1743 = vset.pattern.permute.xlu0 0
      %1744 = vperm.xlu0 %1743, %v1647
      %v1745 = vpop.permute.xlu0 %1744
      %1746 = vset.pattern.permute.xlu0 0
      %1747 = vperm.xlu0 %1746, %v1648
      %v1748 = vpop.permute.xlu0 %1747
      %1749 = vset.pattern.permute.xlu0 0
      %1750 = vperm.xlu0 %1749, %v1649
      %v1751 = vpop.permute.xlu0 %1750
      %1752 = vset.pattern.permute.xlu0 0
      %1753 = vperm.xlu0 %1752, %v1650
      %v1754 = vpop.permute.xlu0 %1753
      %1755 = vset.pattern.permute.xlu0 0
      %1756 = vperm.xlu0 %1755, %v1651
      %v1757 = vpop.permute.xlu0 %1756
      %1758 = vset.pattern.permute.xlu0 0
      %1759 = vperm.xlu0 %1758, %v1652
      %v1760 = vpop.permute.xlu0 %1759
      %1761 = vset.pattern.permute.xlu0 0
      %1762 = vperm.xlu0 %1761, %v1653
      %v1763 = vpop.permute.xlu0 %1762
      %1764 = vset.pattern.permute.xlu0 0
      %1765 = vperm.xlu0 %1764, %v1654
      %v1766 = vpop.permute.xlu0 %1765
      %1767 = vset.pattern.permute.xlu0 0
      %1768 = vperm.xlu0 %1767, %v1655
      %v1769 = vpop.permute.xlu0 %1768
      %1770 = vset.pattern.permute.xlu0 0
      %1771 = vperm.xlu0 %1770, %v1656
      %v1772 = vpop.permute.xlu0 %1771
      %1773 = vset.pattern.permute.xlu0 0
      %1774 = vperm.xlu0 %1773, %v1657
      %v1775 = vpop.permute.xlu0 %1774
      %1776 = vset.pattern.permute.xlu0 0
      %1777 = vperm.xlu0 %1776, %v1658
      %v1778 = vpop.permute.xlu0 %1777
      %1779 = vset.pattern.permute.xlu0 0
      %1780 = vperm.xlu0 %1779, %v1659
      %v1781 = vpop.permute.xlu0 %1780
      %1782 = vset.pattern.permute.xlu0 0
      %1783 = vperm.xlu0 %1782, %v1660
      %v1784 = vpop.permute.xlu0 %1783
      %1785 = vset.pattern.permute.xlu0 0
      %1786 = vperm.xlu0 %1785, %v1661
      %v1787 = vpop.permute.xlu0 %1786
      %1788 = vset.pattern.permute.xlu0 0
      %1789 = vperm.xlu0 %1788, %v1662
      %v1790 = vpop.permute.xlu0 %1789
      %v1791 = vlaneseq
      %v1792 = vand.u32 %v1791, 127
      %v1793 = vlaneseq
      %v1794 = vshrl.u32 %v1793, 7
      %v1795 = vsub.s32 %v1792, %v1794
      %v1796 = vrot.slane %v1697, %v1795
      %v1797 = vadd.s32 %v1792, 4294967288
      %v1798 = vlaneseq
      %v1799 = vshrl.u32 %v1798, 7
      %v1800 = vsub.s32 %v1797, %v1799
      %v1801 = vrot.slane %v1700, %v1800
      %vm1802 = vcmask 130112
      %v1803 = vsel %vm1802, %v1801, %v1796
      %v1804 = vadd.s32 %v1792, 4294967280
      %v1805 = vlaneseq
      %v1806 = vshrl.u32 %v1805, 7
      %v1807 = vsub.s32 %v1804, %v1806
      %v1808 = vrot.slane %v1703, %v1807
      %vm1809 = vcmask 195712
      %v1810 = vsel %vm1809, %v1808, %v1803
      %v1811 = vadd.s32 %v1792, 4294967272
      %v1812 = vlaneseq
      %v1813 = vshrl.u32 %v1812, 7
      %v1814 = vsub.s32 %v1811, %v1813
      %v1815 = vrot.slane %v1706, %v1814
      %vm1816 = vcmask 261312
      %v1817 = vsel %vm1816, %v1815, %v1810
      %v1818 = vadd.s32 %v1792, 4294967264
      %v1819 = vlaneseq
      %v1820 = vshrl.u32 %v1819, 7
      %v1821 = vsub.s32 %v1818, %v1820
      %v1822 = vrot.slane %v1709, %v1821
      %vm1823 = vcmask 326912
      %v1824 = vsel %vm1823, %v1822, %v1817
      %v1825 = vadd.s32 %v1792, 4294967256
      %v1826 = vlaneseq
      %v1827 = vshrl.u32 %v1826, 7
      %v1828 = vsub.s32 %v1825, %v1827
      %v1829 = vrot.slane %v1712, %v1828
      %vm1830 = vcmask 392512
      %v1831 = vsel %vm1830, %v1829, %v1824
      %v1832 = vadd.s32 %v1792, 4294967248
      %v1833 = vlaneseq
      %v1834 = vshrl.u32 %v1833, 7
      %v1835 = vsub.s32 %v1832, %v1834
      %v1836 = vrot.slane %v1715, %v1835
      %vm1837 = vcmask 458112
      %v1838 = vsel %vm1837, %v1836, %v1831
      %v1839 = vadd.s32 %v1792, 4294967240
      %v1840 = vlaneseq
      %v1841 = vshrl.u32 %v1840, 7
      %v1842 = vsub.s32 %v1839, %v1841
      %v1843 = vrot.slane %v1718, %v1842
      %vm1844 = vcmask 523712
      %v1845 = vsel %vm1844, %v1843, %v1838
      %v1846 = vlaneseq
      %v1847 = vshrl.u32 %v1846, 7
      %v1848 = vsub.s32 %v1792, %v1847
      %v1849 = vrot.slane %v1721, %v1848
      %v1850 = vlaneseq
      %v1851 = vshrl.u32 %v1850, 7
      %v1852 = vsub.s32 %v1797, %v1851
      %v1853 = vrot.slane %v1724, %v1852
      %v1854 = vsel %vm1802, %v1853, %v1849
      %v1855 = vlaneseq
      %v1856 = vshrl.u32 %v1855, 7
      %v1857 = vsub.s32 %v1804, %v1856
      %v1858 = vrot.slane %v1727, %v1857
      %v1859 = vsel %vm1809, %v1858, %v1854
      %v1860 = vlaneseq
      %v1861 = vshrl.u32 %v1860, 7
      %v1862 = vsub.s32 %v1811, %v1861
      %v1863 = vrot.slane %v1730, %v1862
      %v1864 = vsel %vm1816, %v1863, %v1859
      %v1865 = vlaneseq
      %v1866 = vshrl.u32 %v1865, 7
      %v1867 = vsub.s32 %v1818, %v1866
      %v1868 = vrot.slane %v1733, %v1867
      %v1869 = vsel %vm1823, %v1868, %v1864
      %v1870 = vlaneseq
      %v1871 = vshrl.u32 %v1870, 7
      %v1872 = vsub.s32 %v1825, %v1871
      %v1873 = vrot.slane %v1736, %v1872
      %v1874 = vsel %vm1830, %v1873, %v1869
      %v1875 = vlaneseq
      %v1876 = vshrl.u32 %v1875, 7
      %v1877 = vsub.s32 %v1832, %v1876
      %v1878 = vrot.slane %v1739, %v1877
      %v1879 = vsel %vm1837, %v1878, %v1874
      %v1880 = vlaneseq
      %v1881 = vshrl.u32 %v1880, 7
      %v1882 = vsub.s32 %v1839, %v1881
      %v1883 = vrot.slane %v1742, %v1882
      %v1884 = vsel %vm1844, %v1883, %v1879
      %v1885 = vlaneseq
      %v1886 = vshrl.u32 %v1885, 7
      %v1887 = vsub.s32 %v1792, %v1886
      %v1888 = vrot.slane %v1745, %v1887
      %v1889 = vlaneseq
      %v1890 = vshrl.u32 %v1889, 7
      %v1891 = vsub.s32 %v1797, %v1890
      %v1892 = vrot.slane %v1748, %v1891
      %v1893 = vsel %vm1802, %v1892, %v1888
      %v1894 = vlaneseq
      %v1895 = vshrl.u32 %v1894, 7
      %v1896 = vsub.s32 %v1804, %v1895
      %v1897 = vrot.slane %v1751, %v1896
      %v1898 = vsel %vm1809, %v1897, %v1893
      %v1899 = vlaneseq
      %v1900 = vshrl.u32 %v1899, 7
      %v1901 = vsub.s32 %v1811, %v1900
      %v1902 = vrot.slane %v1754, %v1901
      %v1903 = vsel %vm1816, %v1902, %v1898
      %v1904 = vlaneseq
      %v1905 = vshrl.u32 %v1904, 7
      %v1906 = vsub.s32 %v1818, %v1905
      %v1907 = vrot.slane %v1757, %v1906
      %v1908 = vsel %vm1823, %v1907, %v1903
      %v1909 = vlaneseq
      %v1910 = vshrl.u32 %v1909, 7
      %v1911 = vsub.s32 %v1825, %v1910
      %v1912 = vrot.slane %v1760, %v1911
      %v1913 = vsel %vm1830, %v1912, %v1908
      %v1914 = vlaneseq
      %v1915 = vshrl.u32 %v1914, 7
      %v1916 = vsub.s32 %v1832, %v1915
      %v1917 = vrot.slane %v1763, %v1916
      %v1918 = vsel %vm1837, %v1917, %v1913
      %v1919 = vlaneseq
      %v1920 = vshrl.u32 %v1919, 7
      %v1921 = vsub.s32 %v1839, %v1920
      %v1922 = vrot.slane %v1766, %v1921
      %v1923 = vsel %vm1844, %v1922, %v1918
      %v1924 = vlaneseq
      %v1925 = vshrl.u32 %v1924, 7
      %v1926 = vsub.s32 %v1792, %v1925
      %v1927 = vrot.slane %v1769, %v1926
      %v1928 = vlaneseq
      %v1929 = vshrl.u32 %v1928, 7
      %v1930 = vsub.s32 %v1797, %v1929
      %v1931 = vrot.slane %v1772, %v1930
      %v1932 = vsel %vm1802, %v1931, %v1927
      %v1933 = vlaneseq
      %v1934 = vshrl.u32 %v1933, 7
      %v1935 = vsub.s32 %v1804, %v1934
      %v1936 = vrot.slane %v1775, %v1935
      %v1937 = vsel %vm1809, %v1936, %v1932
      %v1938 = vlaneseq
      %v1939 = vshrl.u32 %v1938, 7
      %v1940 = vsub.s32 %v1811, %v1939
      %v1941 = vrot.slane %v1778, %v1940
      %v1942 = vsel %vm1816, %v1941, %v1937
      %v1943 = vlaneseq
      %v1944 = vshrl.u32 %v1943, 7
      %v1945 = vsub.s32 %v1818, %v1944
      %v1946 = vrot.slane %v1781, %v1945
      %v1947 = vsel %vm1823, %v1946, %v1942
      %v1948 = vlaneseq
      %v1949 = vshrl.u32 %v1948, 7
      %v1950 = vsub.s32 %v1825, %v1949
      %v1951 = vrot.slane %v1784, %v1950
      %v1952 = vsel %vm1830, %v1951, %v1947
      %v1953 = vlaneseq
      %v1954 = vshrl.u32 %v1953, 7
      %v1955 = vsub.s32 %v1832, %v1954
      %v1956 = vrot.slane %v1787, %v1955
      %v1957 = vsel %vm1837, %v1956, %v1952
      %v1958 = vlaneseq
      %v1959 = vshrl.u32 %v1958, 7
      %v1960 = vsub.s32 %v1839, %v1959
      %v1961 = vrot.slane %v1790, %v1960
      %v1962 = vsel %vm1844, %v1961, %v1957
      %vm1963 = vcmask 1041409
      %v1964 = vsel %vm1963, %v1884, %v1845
      %vm1965 = vcmask 1042434
      %v1966 = vsel %vm1965, %v1923, %v1964
      %vm1967 = vcmask 1043459
      %v1968 = vsel %vm1967, %v1962, %v1966
      %vm1970 = vcmask 519168
      %1971 = vst.msk [vmem:[%s178] sm:$0xf] %vm1970, %v1968
      %v1972 = vsub.f32 %v423, %v1504
      %v1973 = vsub.f32 %v424, %v1506
      %v1974 = vsub.f32 %v425, %v1508
      %v1975 = vsub.f32 %v426, %v1510
      %v1976 = vsub.f32 %v427, %v1512
      %v1977 = vsub.f32 %v428, %v1514
      %v1978 = vsub.f32 %v429, %v1516
      %v1979 = vsub.f32 %v430, %v1518
      %v1980 = vsub.f32 %v559, %v1520
      %v1981 = vsub.f32 %v560, %v1522
      %v1982 = vsub.f32 %v561, %v1524
      %v1983 = vsub.f32 %v562, %v1526
      %v1984 = vsub.f32 %v563, %v1528
      %v1985 = vsub.f32 %v564, %v1530
      %v1986 = vsub.f32 %v565, %v1532
      %v1987 = vsub.f32 %v566, %v1534
      %v1988 = vsub.f32 %v695, %v1536
      %v1989 = vsub.f32 %v696, %v1538
      %v1990 = vsub.f32 %v697, %v1540
      %v1991 = vsub.f32 %v698, %v1542
      %v1992 = vsub.f32 %v699, %v1544
      %v1993 = vsub.f32 %v700, %v1546
      %v1994 = vsub.f32 %v701, %v1548
      %v1995 = vsub.f32 %v702, %v1550
      %v1996 = vsub.f32 %v831, %v1552
      %v1997 = vsub.f32 %v832, %v1554
      %v1998 = vsub.f32 %v833, %v1556
      %v1999 = vsub.f32 %v834, %v1558
      %v2000 = vsub.f32 %v835, %v1560
      %v2001 = vsub.f32 %v836, %v1562
      %v2002 = vsub.f32 %v837, %v1564
      %v2003 = vsub.f32 %v838, %v1566
      %v2004 = vmul.f32 %v1972, 0.25
      %v2005 = vmul.f32 %v1973, 0.25
      %v2006 = vmul.f32 %v1974, 0.25
      %v2007 = vmul.f32 %v1975, 0.25
      %v2008 = vmul.f32 %v1976, 0.25
      %v2009 = vmul.f32 %v1977, 0.25
      %v2010 = vmul.f32 %v1978, 0.25
      %v2011 = vmul.f32 %v1979, 0.25
      %v2012 = vmul.f32 %v1980, 0.25
      %v2013 = vmul.f32 %v1981, 0.25
      %v2014 = vmul.f32 %v1982, 0.25
      %v2015 = vmul.f32 %v1983, 0.25
      %v2016 = vmul.f32 %v1984, 0.25
      %v2017 = vmul.f32 %v1985, 0.25
      %v2018 = vmul.f32 %v1986, 0.25
      %v2019 = vmul.f32 %v1987, 0.25
      %v2020 = vmul.f32 %v1988, 0.25
      %v2021 = vmul.f32 %v1989, 0.25
      %v2022 = vmul.f32 %v1990, 0.25
      %v2023 = vmul.f32 %v1991, 0.25
      %v2024 = vmul.f32 %v1992, 0.25
      %v2025 = vmul.f32 %v1993, 0.25
      %v2026 = vmul.f32 %v1994, 0.25
      %v2027 = vmul.f32 %v1995, 0.25
      %v2028 = vmul.f32 %v1996, 0.25
      %v2029 = vmul.f32 %v1997, 0.25
      %v2030 = vmul.f32 %v1998, 0.25
      %v2031 = vmul.f32 %v1999, 0.25
      %v2032 = vmul.f32 %v2000, 0.25
      %v2033 = vmul.f32 %v2001, 0.25
      %v2034 = vmul.f32 %v2002, 0.25
      %v2035 = vmul.f32 %v2003, 0.25
      %2068 = vset.pattern.permute.xlu0 0
      %2069 = vperm.xlu0 %2068, %v2004
      %v2070 = vpop.permute.xlu0 %2069
      %2071 = vset.pattern.permute.xlu0 0
      %2072 = vperm.xlu0 %2071, %v2005
      %v2073 = vpop.permute.xlu0 %2072
      %2074 = vset.pattern.permute.xlu0 0
      %2075 = vperm.xlu0 %2074, %v2006
      %v2076 = vpop.permute.xlu0 %2075
      %2077 = vset.pattern.permute.xlu0 0
      %2078 = vperm.xlu0 %2077, %v2007
      %v2079 = vpop.permute.xlu0 %2078
      %2080 = vset.pattern.permute.xlu0 0
      %2081 = vperm.xlu0 %2080, %v2008
      %v2082 = vpop.permute.xlu0 %2081
      %2083 = vset.pattern.permute.xlu0 0
      %2084 = vperm.xlu0 %2083, %v2009
      %v2085 = vpop.permute.xlu0 %2084
      %2086 = vset.pattern.permute.xlu0 0
      %2087 = vperm.xlu0 %2086, %v2010
      %v2088 = vpop.permute.xlu0 %2087
      %2089 = vset.pattern.permute.xlu0 0
      %2090 = vperm.xlu0 %2089, %v2011
      %v2091 = vpop.permute.xlu0 %2090
      %2092 = vset.pattern.permute.xlu0 0
      %2093 = vperm.xlu0 %2092, %v2012
      %v2094 = vpop.permute.xlu0 %2093
      %2095 = vset.pattern.permute.xlu0 0
      %2096 = vperm.xlu0 %2095, %v2013
      %v2097 = vpop.permute.xlu0 %2096
      %2098 = vset.pattern.permute.xlu0 0
      %2099 = vperm.xlu0 %2098, %v2014
      %v2100 = vpop.permute.xlu0 %2099
      %2101 = vset.pattern.permute.xlu0 0
      %2102 = vperm.xlu0 %2101, %v2015
      %v2103 = vpop.permute.xlu0 %2102
      %2104 = vset.pattern.permute.xlu0 0
      %2105 = vperm.xlu0 %2104, %v2016
      %v2106 = vpop.permute.xlu0 %2105
      %2107 = vset.pattern.permute.xlu0 0
      %2108 = vperm.xlu0 %2107, %v2017
      %v2109 = vpop.permute.xlu0 %2108
      %2110 = vset.pattern.permute.xlu0 0
      %2111 = vperm.xlu0 %2110, %v2018
      %v2112 = vpop.permute.xlu0 %2111
      %2113 = vset.pattern.permute.xlu0 0
      %2114 = vperm.xlu0 %2113, %v2019
      %v2115 = vpop.permute.xlu0 %2114
      %2116 = vset.pattern.permute.xlu0 0
      %2117 = vperm.xlu0 %2116, %v2020
      %v2118 = vpop.permute.xlu0 %2117
      %2119 = vset.pattern.permute.xlu0 0
      %2120 = vperm.xlu0 %2119, %v2021
      %v2121 = vpop.permute.xlu0 %2120
      %2122 = vset.pattern.permute.xlu0 0
      %2123 = vperm.xlu0 %2122, %v2022
      %v2124 = vpop.permute.xlu0 %2123
      %2125 = vset.pattern.permute.xlu0 0
      %2126 = vperm.xlu0 %2125, %v2023
      %v2127 = vpop.permute.xlu0 %2126
      %2128 = vset.pattern.permute.xlu0 0
      %2129 = vperm.xlu0 %2128, %v2024
      %v2130 = vpop.permute.xlu0 %2129
      %2131 = vset.pattern.permute.xlu0 0
      %2132 = vperm.xlu0 %2131, %v2025
      %v2133 = vpop.permute.xlu0 %2132
      %2134 = vset.pattern.permute.xlu0 0
      %2135 = vperm.xlu0 %2134, %v2026
      %v2136 = vpop.permute.xlu0 %2135
      %2137 = vset.pattern.permute.xlu0 0
      %2138 = vperm.xlu0 %2137, %v2027
      %v2139 = vpop.permute.xlu0 %2138
      %2140 = vset.pattern.permute.xlu0 0
      %2141 = vperm.xlu0 %2140, %v2028
      %v2142 = vpop.permute.xlu0 %2141
      %2143 = vset.pattern.permute.xlu0 0
      %2144 = vperm.xlu0 %2143, %v2029
      %v2145 = vpop.permute.xlu0 %2144
      %2146 = vset.pattern.permute.xlu0 0
      %2147 = vperm.xlu0 %2146, %v2030
      %v2148 = vpop.permute.xlu0 %2147
      %2149 = vset.pattern.permute.xlu0 0
      %2150 = vperm.xlu0 %2149, %v2031
      %v2151 = vpop.permute.xlu0 %2150
      %2152 = vset.pattern.permute.xlu0 0
      %2153 = vperm.xlu0 %2152, %v2032
      %v2154 = vpop.permute.xlu0 %2153
      %2155 = vset.pattern.permute.xlu0 0
      %2156 = vperm.xlu0 %2155, %v2033
      %v2157 = vpop.permute.xlu0 %2156
      %2158 = vset.pattern.permute.xlu0 0
      %2159 = vperm.xlu0 %2158, %v2034
      %v2160 = vpop.permute.xlu0 %2159
      %2161 = vset.pattern.permute.xlu0 0
      %2162 = vperm.xlu0 %2161, %v2035
      %v2163 = vpop.permute.xlu0 %2162
      %v2164 = vlaneseq
      %v2165 = vshrl.u32 %v2164, 7
      %v2166 = vsub.s32 %v1792, %v2165
      %v2167 = vrot.slane %v2070, %v2166
      %v2168 = vlaneseq
      %v2169 = vshrl.u32 %v2168, 7
      %v2170 = vsub.s32 %v1797, %v2169
      %v2171 = vrot.slane %v2073, %v2170
      %v2172 = vsel %vm1802, %v2171, %v2167
      %v2173 = vlaneseq
      %v2174 = vshrl.u32 %v2173, 7
      %v2175 = vsub.s32 %v1804, %v2174
      %v2176 = vrot.slane %v2076, %v2175
      %v2177 = vsel %vm1809, %v2176, %v2172
      %v2178 = vlaneseq
      %v2179 = vshrl.u32 %v2178, 7
      %v2180 = vsub.s32 %v1811, %v2179
      %v2181 = vrot.slane %v2079, %v2180
      %v2182 = vsel %vm1816, %v2181, %v2177
      %v2183 = vlaneseq
      %v2184 = vshrl.u32 %v2183, 7
      %v2185 = vsub.s32 %v1818, %v2184
      %v2186 = vrot.slane %v2082, %v2185
      %v2187 = vsel %vm1823, %v2186, %v2182
      %v2188 = vlaneseq
      %v2189 = vshrl.u32 %v2188, 7
      %v2190 = vsub.s32 %v1825, %v2189
      %v2191 = vrot.slane %v2085, %v2190
      %v2192 = vsel %vm1830, %v2191, %v2187
      %v2193 = vlaneseq
      %v2194 = vshrl.u32 %v2193, 7
      %v2195 = vsub.s32 %v1832, %v2194
      %v2196 = vrot.slane %v2088, %v2195
      %v2197 = vsel %vm1837, %v2196, %v2192
      %v2198 = vlaneseq
      %v2199 = vshrl.u32 %v2198, 7
      %v2200 = vsub.s32 %v1839, %v2199
      %v2201 = vrot.slane %v2091, %v2200
      %v2202 = vsel %vm1844, %v2201, %v2197
      %v2203 = vlaneseq
      %v2204 = vshrl.u32 %v2203, 7
      %v2205 = vsub.s32 %v1792, %v2204
      %v2206 = vrot.slane %v2094, %v2205
      %v2207 = vlaneseq
      %v2208 = vshrl.u32 %v2207, 7
      %v2209 = vsub.s32 %v1797, %v2208
      %v2210 = vrot.slane %v2097, %v2209
      %v2211 = vsel %vm1802, %v2210, %v2206
      %v2212 = vlaneseq
      %v2213 = vshrl.u32 %v2212, 7
      %v2214 = vsub.s32 %v1804, %v2213
      %v2215 = vrot.slane %v2100, %v2214
      %v2216 = vsel %vm1809, %v2215, %v2211
      %v2217 = vlaneseq
      %v2218 = vshrl.u32 %v2217, 7
      %v2219 = vsub.s32 %v1811, %v2218
      %v2220 = vrot.slane %v2103, %v2219
      %v2221 = vsel %vm1816, %v2220, %v2216
      %v2222 = vlaneseq
      %v2223 = vshrl.u32 %v2222, 7
      %v2224 = vsub.s32 %v1818, %v2223
      %v2225 = vrot.slane %v2106, %v2224
      %v2226 = vsel %vm1823, %v2225, %v2221
      %v2227 = vlaneseq
      %v2228 = vshrl.u32 %v2227, 7
      %v2229 = vsub.s32 %v1825, %v2228
      %v2230 = vrot.slane %v2109, %v2229
      %v2231 = vsel %vm1830, %v2230, %v2226
      %v2232 = vlaneseq
      %v2233 = vshrl.u32 %v2232, 7
      %v2234 = vsub.s32 %v1832, %v2233
      %v2235 = vrot.slane %v2112, %v2234
      %v2236 = vsel %vm1837, %v2235, %v2231
      %v2237 = vlaneseq
      %v2238 = vshrl.u32 %v2237, 7
      %v2239 = vsub.s32 %v1839, %v2238
      %v2240 = vrot.slane %v2115, %v2239
      %v2241 = vsel %vm1844, %v2240, %v2236
      %v2242 = vlaneseq
      %v2243 = vshrl.u32 %v2242, 7
      %v2244 = vsub.s32 %v1792, %v2243
      %v2245 = vrot.slane %v2118, %v2244
      %v2246 = vlaneseq
      %v2247 = vshrl.u32 %v2246, 7
      %v2248 = vsub.s32 %v1797, %v2247
      %v2249 = vrot.slane %v2121, %v2248
      %v2250 = vsel %vm1802, %v2249, %v2245
      %v2251 = vlaneseq
      %v2252 = vshrl.u32 %v2251, 7
      %v2253 = vsub.s32 %v1804, %v2252
      %v2254 = vrot.slane %v2124, %v2253
      %v2255 = vsel %vm1809, %v2254, %v2250
      %v2256 = vlaneseq
      %v2257 = vshrl.u32 %v2256, 7
      %v2258 = vsub.s32 %v1811, %v2257
      %v2259 = vrot.slane %v2127, %v2258
      %v2260 = vsel %vm1816, %v2259, %v2255
      %v2261 = vlaneseq
      %v2262 = vshrl.u32 %v2261, 7
      %v2263 = vsub.s32 %v1818, %v2262
      %v2264 = vrot.slane %v2130, %v2263
      %v2265 = vsel %vm1823, %v2264, %v2260
      %v2266 = vlaneseq
      %v2267 = vshrl.u32 %v2266, 7
      %v2268 = vsub.s32 %v1825, %v2267
      %v2269 = vrot.slane %v2133, %v2268
      %v2270 = vsel %vm1830, %v2269, %v2265
      %v2271 = vlaneseq
      %v2272 = vshrl.u32 %v2271, 7
      %v2273 = vsub.s32 %v1832, %v2272
      %v2274 = vrot.slane %v2136, %v2273
      %v2275 = vsel %vm1837, %v2274, %v2270
      %v2276 = vlaneseq
      %v2277 = vshrl.u32 %v2276, 7
      %v2278 = vsub.s32 %v1839, %v2277
      %v2279 = vrot.slane %v2139, %v2278
      %v2280 = vsel %vm1844, %v2279, %v2275
      %v2281 = vlaneseq
      %v2282 = vshrl.u32 %v2281, 7
      %v2283 = vsub.s32 %v1792, %v2282
      %v2284 = vrot.slane %v2142, %v2283
      %v2285 = vlaneseq
      %v2286 = vshrl.u32 %v2285, 7
      %v2287 = vsub.s32 %v1797, %v2286
      %v2288 = vrot.slane %v2145, %v2287
      %v2289 = vsel %vm1802, %v2288, %v2284
      %v2290 = vlaneseq
      %v2291 = vshrl.u32 %v2290, 7
      %v2292 = vsub.s32 %v1804, %v2291
      %v2293 = vrot.slane %v2148, %v2292
      %v2294 = vsel %vm1809, %v2293, %v2289
      %v2295 = vlaneseq
      %v2296 = vshrl.u32 %v2295, 7
      %v2297 = vsub.s32 %v1811, %v2296
      %v2298 = vrot.slane %v2151, %v2297
      %v2299 = vsel %vm1816, %v2298, %v2294
      %v2300 = vlaneseq
      %v2301 = vshrl.u32 %v2300, 7
      %v2302 = vsub.s32 %v1818, %v2301
      %v2303 = vrot.slane %v2154, %v2302
      %v2304 = vsel %vm1823, %v2303, %v2299
      %v2305 = vlaneseq
      %v2306 = vshrl.u32 %v2305, 7
      %v2307 = vsub.s32 %v1825, %v2306
      %v2308 = vrot.slane %v2157, %v2307
      %v2309 = vsel %vm1830, %v2308, %v2304
      %v2310 = vlaneseq
      %v2311 = vshrl.u32 %v2310, 7
      %v2312 = vsub.s32 %v1832, %v2311
      %v2313 = vrot.slane %v2160, %v2312
      %v2314 = vsel %vm1837, %v2313, %v2309
      %v2315 = vlaneseq
      %v2316 = vshrl.u32 %v2315, 7
      %v2317 = vsub.s32 %v1839, %v2316
      %v2318 = vrot.slane %v2163, %v2317
      %v2319 = vsel %vm1844, %v2318, %v2314
      %v2320 = vsel %vm1963, %v2241, %v2202
      %v2321 = vsel %vm1965, %v2280, %v2320
      %v2322 = vsel %vm1967, %v2319, %v2321
      %s2324 = scalar_lea.vmem %s178, 4
      %2325 = vst.msk [vmem:[%s2324] sm:$0xf] %vm1970, %v2322
      %2358 = vrot.lane.b32.xlu0 %v1055, 127
      %v2359 = vpop.permute.xlu0 %2358
      %2360 = vrot.lane.b32.xlu0 %v1056, 127
      %v2361 = vpop.permute.xlu0 %2360
      %2362 = vrot.lane.b32.xlu0 %v1057, 127
      %v2363 = vpop.permute.xlu0 %2362
      %2364 = vrot.lane.b32.xlu0 %v1058, 127
      %v2365 = vpop.permute.xlu0 %2364
      %2366 = vrot.lane.b32.xlu0 %v1059, 127
      %v2367 = vpop.permute.xlu0 %2366
      %2368 = vrot.lane.b32.xlu0 %v1060, 127
      %v2369 = vpop.permute.xlu0 %2368
      %2370 = vrot.lane.b32.xlu0 %v1061, 127
      %v2371 = vpop.permute.xlu0 %2370
      %2372 = vrot.lane.b32.xlu0 %v1062, 127
      %v2373 = vpop.permute.xlu0 %2372
      %2374 = vrot.lane.b32.xlu0 %v1191, 127
      %v2375 = vpop.permute.xlu0 %2374
      %2376 = vrot.lane.b32.xlu0 %v1192, 127
      %v2377 = vpop.permute.xlu0 %2376
      %2378 = vrot.lane.b32.xlu0 %v1193, 127
      %v2379 = vpop.permute.xlu0 %2378
      %2380 = vrot.lane.b32.xlu0 %v1194, 127
      %v2381 = vpop.permute.xlu0 %2380
      %2382 = vrot.lane.b32.xlu0 %v1195, 127
      %v2383 = vpop.permute.xlu0 %2382
      %2384 = vrot.lane.b32.xlu0 %v1196, 127
      %v2385 = vpop.permute.xlu0 %2384
      %2386 = vrot.lane.b32.xlu0 %v1197, 127
      %v2387 = vpop.permute.xlu0 %2386
      %2388 = vrot.lane.b32.xlu0 %v1198, 127
      %v2389 = vpop.permute.xlu0 %2388
      %2390 = vrot.lane.b32.xlu0 %v1327, 127
      %v2391 = vpop.permute.xlu0 %2390
      %2392 = vrot.lane.b32.xlu0 %v1328, 127
      %v2393 = vpop.permute.xlu0 %2392
      %2394 = vrot.lane.b32.xlu0 %v1329, 127
      %v2395 = vpop.permute.xlu0 %2394
      %2396 = vrot.lane.b32.xlu0 %v1330, 127
      %v2397 = vpop.permute.xlu0 %2396
      %2398 = vrot.lane.b32.xlu0 %v1331, 127
      %v2399 = vpop.permute.xlu0 %2398
      %2400 = vrot.lane.b32.xlu0 %v1332, 127
      %v2401 = vpop.permute.xlu0 %2400
      %2402 = vrot.lane.b32.xlu0 %v1333, 127
      %v2403 = vpop.permute.xlu0 %2402
      %2404 = vrot.lane.b32.xlu0 %v1334, 127
      %v2405 = vpop.permute.xlu0 %2404
      %2406 = vrot.lane.b32.xlu0 %v1463, 127
      %v2407 = vpop.permute.xlu0 %2406
      %2408 = vrot.lane.b32.xlu0 %v1464, 127
      %v2409 = vpop.permute.xlu0 %2408
      %2410 = vrot.lane.b32.xlu0 %v1465, 127
      %v2411 = vpop.permute.xlu0 %2410
      %2412 = vrot.lane.b32.xlu0 %v1466, 127
      %v2413 = vpop.permute.xlu0 %2412
      %2414 = vrot.lane.b32.xlu0 %v1467, 127
      %v2415 = vpop.permute.xlu0 %2414
      %2416 = vrot.lane.b32.xlu0 %v1468, 127
      %v2417 = vpop.permute.xlu0 %2416
      %2418 = vrot.lane.b32.xlu0 %v1469, 127
      %v2419 = vpop.permute.xlu0 %2418
      %2420 = vrot.lane.b32.xlu0 %v1470, 127
      %v2421 = vpop.permute.xlu0 %2420
      %v2454 = vadd.f32 %v1055, %v2359
      %v2455 = vadd.f32 %v1056, %v2361
      %v2456 = vadd.f32 %v1057, %v2363
      %v2457 = vadd.f32 %v1058, %v2365
      %v2458 = vadd.f32 %v1059, %v2367
      %v2459 = vadd.f32 %v1060, %v2369
      %v2460 = vadd.f32 %v1061, %v2371
      %v2461 = vadd.f32 %v1062, %v2373
      %v2462 = vadd.f32 %v1191, %v2375
      %v2463 = vadd.f32 %v1192, %v2377
      %v2464 = vadd.f32 %v1193, %v2379
      %v2465 = vadd.f32 %v1194, %v2381
      %v2466 = vadd.f32 %v1195, %v2383
      %v2467 = vadd.f32 %v1196, %v2385
      %v2468 = vadd.f32 %v1197, %v2387
      %v2469 = vadd.f32 %v1198, %v2389
      %v2470 = vadd.f32 %v1327, %v2391
      %v2471 = vadd.f32 %v1328, %v2393
      %v2472 = vadd.f32 %v1329, %v2395
      %v2473 = vadd.f32 %v1330, %v2397
      %v2474 = vadd.f32 %v1331, %v2399
      %v2475 = vadd.f32 %v1332, %v2401
      %v2476 = vadd.f32 %v1333, %v2403
      %v2477 = vadd.f32 %v1334, %v2405
      %v2478 = vadd.f32 %v1463, %v2407
      %v2479 = vadd.f32 %v1464, %v2409
      %v2480 = vadd.f32 %v1465, %v2411
      %v2481 = vadd.f32 %v1466, %v2413
      %v2482 = vadd.f32 %v1467, %v2415
      %v2483 = vadd.f32 %v1468, %v2417
      %v2484 = vadd.f32 %v1469, %v2419
      %v2485 = vadd.f32 %v1470, %v2421
      %v2486 = vmul.f32 %v2454, 0.25
      %v2487 = vmul.f32 %v2455, 0.25
      %v2488 = vmul.f32 %v2456, 0.25
      %v2489 = vmul.f32 %v2457, 0.25
      %v2490 = vmul.f32 %v2458, 0.25
      %v2491 = vmul.f32 %v2459, 0.25
      %v2492 = vmul.f32 %v2460, 0.25
      %v2493 = vmul.f32 %v2461, 0.25
      %v2494 = vmul.f32 %v2462, 0.25
      %v2495 = vmul.f32 %v2463, 0.25
      %v2496 = vmul.f32 %v2464, 0.25
      %v2497 = vmul.f32 %v2465, 0.25
      %v2498 = vmul.f32 %v2466, 0.25
      %v2499 = vmul.f32 %v2467, 0.25
      %v2500 = vmul.f32 %v2468, 0.25
      %v2501 = vmul.f32 %v2469, 0.25
      %v2502 = vmul.f32 %v2470, 0.25
      %v2503 = vmul.f32 %v2471, 0.25
      %v2504 = vmul.f32 %v2472, 0.25
      %v2505 = vmul.f32 %v2473, 0.25
      %v2506 = vmul.f32 %v2474, 0.25
      %v2507 = vmul.f32 %v2475, 0.25
      %v2508 = vmul.f32 %v2476, 0.25
      %v2509 = vmul.f32 %v2477, 0.25
      %v2510 = vmul.f32 %v2478, 0.25
      %v2511 = vmul.f32 %v2479, 0.25
      %v2512 = vmul.f32 %v2480, 0.25
      %v2513 = vmul.f32 %v2481, 0.25
      %v2514 = vmul.f32 %v2482, 0.25
      %v2515 = vmul.f32 %v2483, 0.25
      %v2516 = vmul.f32 %v2484, 0.25
      %v2517 = vmul.f32 %v2485, 0.25
      %2550 = vset.pattern.permute.xlu0 0
      %2551 = vperm.xlu0 %2550, %v2486
      %v2552 = vpop.permute.xlu0 %2551
      %2553 = vset.pattern.permute.xlu0 0
      %2554 = vperm.xlu0 %2553, %v2487
      %v2555 = vpop.permute.xlu0 %2554
      %2556 = vset.pattern.permute.xlu0 0
      %2557 = vperm.xlu0 %2556, %v2488
      %v2558 = vpop.permute.xlu0 %2557
      %2559 = vset.pattern.permute.xlu0 0
      %2560 = vperm.xlu0 %2559, %v2489
      %v2561 = vpop.permute.xlu0 %2560
      %2562 = vset.pattern.permute.xlu0 0
      %2563 = vperm.xlu0 %2562, %v2490
      %v2564 = vpop.permute.xlu0 %2563
      %2565 = vset.pattern.permute.xlu0 0
      %2566 = vperm.xlu0 %2565, %v2491
      %v2567 = vpop.permute.xlu0 %2566
      %2568 = vset.pattern.permute.xlu0 0
      %2569 = vperm.xlu0 %2568, %v2492
      %v2570 = vpop.permute.xlu0 %2569
      %2571 = vset.pattern.permute.xlu0 0
      %2572 = vperm.xlu0 %2571, %v2493
      %v2573 = vpop.permute.xlu0 %2572
      %2574 = vset.pattern.permute.xlu0 0
      %2575 = vperm.xlu0 %2574, %v2494
      %v2576 = vpop.permute.xlu0 %2575
      %2577 = vset.pattern.permute.xlu0 0
      %2578 = vperm.xlu0 %2577, %v2495
      %v2579 = vpop.permute.xlu0 %2578
      %2580 = vset.pattern.permute.xlu0 0
      %2581 = vperm.xlu0 %2580, %v2496
      %v2582 = vpop.permute.xlu0 %2581
      %2583 = vset.pattern.permute.xlu0 0
      %2584 = vperm.xlu0 %2583, %v2497
      %v2585 = vpop.permute.xlu0 %2584
      %2586 = vset.pattern.permute.xlu0 0
      %2587 = vperm.xlu0 %2586, %v2498
      %v2588 = vpop.permute.xlu0 %2587
      %2589 = vset.pattern.permute.xlu0 0
      %2590 = vperm.xlu0 %2589, %v2499
      %v2591 = vpop.permute.xlu0 %2590
      %2592 = vset.pattern.permute.xlu0 0
      %2593 = vperm.xlu0 %2592, %v2500
      %v2594 = vpop.permute.xlu0 %2593
      %2595 = vset.pattern.permute.xlu0 0
      %2596 = vperm.xlu0 %2595, %v2501
      %v2597 = vpop.permute.xlu0 %2596
      %2598 = vset.pattern.permute.xlu0 0
      %2599 = vperm.xlu0 %2598, %v2502
      %v2600 = vpop.permute.xlu0 %2599
      %2601 = vset.pattern.permute.xlu0 0
      %2602 = vperm.xlu0 %2601, %v2503
      %v2603 = vpop.permute.xlu0 %2602
      %2604 = vset.pattern.permute.xlu0 0
      %2605 = vperm.xlu0 %2604, %v2504
      %v2606 = vpop.permute.xlu0 %2605
      %2607 = vset.pattern.permute.xlu0 0
      %2608 = vperm.xlu0 %2607, %v2505
      %v2609 = vpop.permute.xlu0 %2608
      %2610 = vset.pattern.permute.xlu0 0
      %2611 = vperm.xlu0 %2610, %v2506
      %v2612 = vpop.permute.xlu0 %2611
      %2613 = vset.pattern.permute.xlu0 0
      %2614 = vperm.xlu0 %2613, %v2507
      %v2615 = vpop.permute.xlu0 %2614
      %2616 = vset.pattern.permute.xlu0 0
      %2617 = vperm.xlu0 %2616, %v2508
      %v2618 = vpop.permute.xlu0 %2617
      %2619 = vset.pattern.permute.xlu0 0
      %2620 = vperm.xlu0 %2619, %v2509
      %v2621 = vpop.permute.xlu0 %2620
      %2622 = vset.pattern.permute.xlu0 0
      %2623 = vperm.xlu0 %2622, %v2510
      %v2624 = vpop.permute.xlu0 %2623
      %2625 = vset.pattern.permute.xlu0 0
      %2626 = vperm.xlu0 %2625, %v2511
      %v2627 = vpop.permute.xlu0 %2626
      %2628 = vset.pattern.permute.xlu0 0
      %2629 = vperm.xlu0 %2628, %v2512
      %v2630 = vpop.permute.xlu0 %2629
      %2631 = vset.pattern.permute.xlu0 0
      %2632 = vperm.xlu0 %2631, %v2513
      %v2633 = vpop.permute.xlu0 %2632
      %2634 = vset.pattern.permute.xlu0 0
      %2635 = vperm.xlu0 %2634, %v2514
      %v2636 = vpop.permute.xlu0 %2635
      %2637 = vset.pattern.permute.xlu0 0
      %2638 = vperm.xlu0 %2637, %v2515
      %v2639 = vpop.permute.xlu0 %2638
      %2640 = vset.pattern.permute.xlu0 0
      %2641 = vperm.xlu0 %2640, %v2516
      %v2642 = vpop.permute.xlu0 %2641
      %2643 = vset.pattern.permute.xlu0 0
      %2644 = vperm.xlu0 %2643, %v2517
      %v2645 = vpop.permute.xlu0 %2644
      %v2646 = vlaneseq
      %v2647 = vshrl.u32 %v2646, 7
      %v2648 = vsub.s32 %v1792, %v2647
      %v2649 = vrot.slane %v2552, %v2648
      %v2650 = vlaneseq
      %v2651 = vshrl.u32 %v2650, 7
      %v2652 = vsub.s32 %v1797, %v2651
      %v2653 = vrot.slane %v2555, %v2652
      %v2654 = vsel %vm1802, %v2653, %v2649
      %v2655 = vlaneseq
      %v2656 = vshrl.u32 %v2655, 7
      %v2657 = vsub.s32 %v1804, %v2656
      %v2658 = vrot.slane %v2558, %v2657
      %v2659 = vsel %vm1809, %v2658, %v2654
      %v2660 = vlaneseq
      %v2661 = vshrl.u32 %v2660, 7
      %v2662 = vsub.s32 %v1811, %v2661
      %v2663 = vrot.slane %v2561, %v2662
      %v2664 = vsel %vm1816, %v2663, %v2659
      %v2665 = vlaneseq
      %v2666 = vshrl.u32 %v2665, 7
      %v2667 = vsub.s32 %v1818, %v2666
      %v2668 = vrot.slane %v2564, %v2667
      %v2669 = vsel %vm1823, %v2668, %v2664
      %v2670 = vlaneseq
      %v2671 = vshrl.u32 %v2670, 7
      %v2672 = vsub.s32 %v1825, %v2671
      %v2673 = vrot.slane %v2567, %v2672
      %v2674 = vsel %vm1830, %v2673, %v2669
      %v2675 = vlaneseq
      %v2676 = vshrl.u32 %v2675, 7
      %v2677 = vsub.s32 %v1832, %v2676
      %v2678 = vrot.slane %v2570, %v2677
      %v2679 = vsel %vm1837, %v2678, %v2674
      %v2680 = vlaneseq
      %v2681 = vshrl.u32 %v2680, 7
      %v2682 = vsub.s32 %v1839, %v2681
      %v2683 = vrot.slane %v2573, %v2682
      %v2684 = vsel %vm1844, %v2683, %v2679
      %v2685 = vlaneseq
      %v2686 = vshrl.u32 %v2685, 7
      %v2687 = vsub.s32 %v1792, %v2686
      %v2688 = vrot.slane %v2576, %v2687
      %v2689 = vlaneseq
      %v2690 = vshrl.u32 %v2689, 7
      %v2691 = vsub.s32 %v1797, %v2690
      %v2692 = vrot.slane %v2579, %v2691
      %v2693 = vsel %vm1802, %v2692, %v2688
      %v2694 = vlaneseq
      %v2695 = vshrl.u32 %v2694, 7
      %v2696 = vsub.s32 %v1804, %v2695
      %v2697 = vrot.slane %v2582, %v2696
      %v2698 = vsel %vm1809, %v2697, %v2693
      %v2699 = vlaneseq
      %v2700 = vshrl.u32 %v2699, 7
      %v2701 = vsub.s32 %v1811, %v2700
      %v2702 = vrot.slane %v2585, %v2701
      %v2703 = vsel %vm1816, %v2702, %v2698
      %v2704 = vlaneseq
      %v2705 = vshrl.u32 %v2704, 7
      %v2706 = vsub.s32 %v1818, %v2705
      %v2707 = vrot.slane %v2588, %v2706
      %v2708 = vsel %vm1823, %v2707, %v2703
      %v2709 = vlaneseq
      %v2710 = vshrl.u32 %v2709, 7
      %v2711 = vsub.s32 %v1825, %v2710
      %v2712 = vrot.slane %v2591, %v2711
      %v2713 = vsel %vm1830, %v2712, %v2708
      %v2714 = vlaneseq
      %v2715 = vshrl.u32 %v2714, 7
      %v2716 = vsub.s32 %v1832, %v2715
      %v2717 = vrot.slane %v2594, %v2716
      %v2718 = vsel %vm1837, %v2717, %v2713
      %v2719 = vlaneseq
      %v2720 = vshrl.u32 %v2719, 7
      %v2721 = vsub.s32 %v1839, %v2720
      %v2722 = vrot.slane %v2597, %v2721
      %v2723 = vsel %vm1844, %v2722, %v2718
      %v2724 = vlaneseq
      %v2725 = vshrl.u32 %v2724, 7
      %v2726 = vsub.s32 %v1792, %v2725
      %v2727 = vrot.slane %v2600, %v2726
      %v2728 = vlaneseq
      %v2729 = vshrl.u32 %v2728, 7
      %v2730 = vsub.s32 %v1797, %v2729
      %v2731 = vrot.slane %v2603, %v2730
      %v2732 = vsel %vm1802, %v2731, %v2727
      %v2733 = vlaneseq
      %v2734 = vshrl.u32 %v2733, 7
      %v2735 = vsub.s32 %v1804, %v2734
      %v2736 = vrot.slane %v2606, %v2735
      %v2737 = vsel %vm1809, %v2736, %v2732
      %v2738 = vlaneseq
      %v2739 = vshrl.u32 %v2738, 7
      %v2740 = vsub.s32 %v1811, %v2739
      %v2741 = vrot.slane %v2609, %v2740
      %v2742 = vsel %vm1816, %v2741, %v2737
      %v2743 = vlaneseq
      %v2744 = vshrl.u32 %v2743, 7
      %v2745 = vsub.s32 %v1818, %v2744
      %v2746 = vrot.slane %v2612, %v2745
      %v2747 = vsel %vm1823, %v2746, %v2742
      %v2748 = vlaneseq
      %v2749 = vshrl.u32 %v2748, 7
      %v2750 = vsub.s32 %v1825, %v2749
      %v2751 = vrot.slane %v2615, %v2750
      %v2752 = vsel %vm1830, %v2751, %v2747
      %v2753 = vlaneseq
      %v2754 = vshrl.u32 %v2753, 7
      %v2755 = vsub.s32 %v1832, %v2754
      %v2756 = vrot.slane %v2618, %v2755
      %v2757 = vsel %vm1837, %v2756, %v2752
      %v2758 = vlaneseq
      %v2759 = vshrl.u32 %v2758, 7
      %v2760 = vsub.s32 %v1839, %v2759
      %v2761 = vrot.slane %v2621, %v2760
      %v2762 = vsel %vm1844, %v2761, %v2757
      %v2763 = vlaneseq
      %v2764 = vshrl.u32 %v2763, 7
      %v2765 = vsub.s32 %v1792, %v2764
      %v2766 = vrot.slane %v2624, %v2765
      %v2767 = vlaneseq
      %v2768 = vshrl.u32 %v2767, 7
      %v2769 = vsub.s32 %v1797, %v2768
      %v2770 = vrot.slane %v2627, %v2769
      %v2771 = vsel %vm1802, %v2770, %v2766
      %v2772 = vlaneseq
      %v2773 = vshrl.u32 %v2772, 7
      %v2774 = vsub.s32 %v1804, %v2773
      %v2775 = vrot.slane %v2630, %v2774
      %v2776 = vsel %vm1809, %v2775, %v2771
      %v2777 = vlaneseq
      %v2778 = vshrl.u32 %v2777, 7
      %v2779 = vsub.s32 %v1811, %v2778
      %v2780 = vrot.slane %v2633, %v2779
      %v2781 = vsel %vm1816, %v2780, %v2776
      %v2782 = vlaneseq
      %v2783 = vshrl.u32 %v2782, 7
      %v2784 = vsub.s32 %v1818, %v2783
      %v2785 = vrot.slane %v2636, %v2784
      %v2786 = vsel %vm1823, %v2785, %v2781
      %v2787 = vlaneseq
      %v2788 = vshrl.u32 %v2787, 7
      %v2789 = vsub.s32 %v1825, %v2788
      %v2790 = vrot.slane %v2639, %v2789
      %v2791 = vsel %vm1830, %v2790, %v2786
      %v2792 = vlaneseq
      %v2793 = vshrl.u32 %v2792, 7
      %v2794 = vsub.s32 %v1832, %v2793
      %v2795 = vrot.slane %v2642, %v2794
      %v2796 = vsel %vm1837, %v2795, %v2791
      %v2797 = vlaneseq
      %v2798 = vshrl.u32 %v2797, 7
      %v2799 = vsub.s32 %v1839, %v2798
      %v2800 = vrot.slane %v2645, %v2799
      %v2801 = vsel %vm1844, %v2800, %v2796
      %v2802 = vsel %vm1963, %v2723, %v2684
      %v2803 = vsel %vm1965, %v2762, %v2802
      %v2804 = vsel %vm1967, %v2801, %v2803
      %s2806 = scalar_lea.vmem %s178, 8
      %2807 = vst.msk [vmem:[%s2806] sm:$0xf] %vm1970, %v2804
      %v2808 = vsub.f32 %v1055, %v2359
      %v2809 = vsub.f32 %v1056, %v2361
      %v2810 = vsub.f32 %v1057, %v2363
      %v2811 = vsub.f32 %v1058, %v2365
      %v2812 = vsub.f32 %v1059, %v2367
      %v2813 = vsub.f32 %v1060, %v2369
      %v2814 = vsub.f32 %v1061, %v2371
      %v2815 = vsub.f32 %v1062, %v2373
      %v2816 = vsub.f32 %v1191, %v2375
      %v2817 = vsub.f32 %v1192, %v2377
      %v2818 = vsub.f32 %v1193, %v2379
      %v2819 = vsub.f32 %v1194, %v2381
      %v2820 = vsub.f32 %v1195, %v2383
      %v2821 = vsub.f32 %v1196, %v2385
      %v2822 = vsub.f32 %v1197, %v2387
      %v2823 = vsub.f32 %v1198, %v2389
      %v2824 = vsub.f32 %v1327, %v2391
      %v2825 = vsub.f32 %v1328, %v2393
      %v2826 = vsub.f32 %v1329, %v2395
      %v2827 = vsub.f32 %v1330, %v2397
      %v2828 = vsub.f32 %v1331, %v2399
      %v2829 = vsub.f32 %v1332, %v2401
      %v2830 = vsub.f32 %v1333, %v2403
      %v2831 = vsub.f32 %v1334, %v2405
      %v2832 = vsub.f32 %v1463, %v2407
      %v2833 = vsub.f32 %v1464, %v2409
      %v2834 = vsub.f32 %v1465, %v2411
      %v2835 = vsub.f32 %v1466, %v2413
      %v2836 = vsub.f32 %v1467, %v2415
      %v2837 = vsub.f32 %v1468, %v2417
      %v2838 = vsub.f32 %v1469, %v2419
      %v2839 = vsub.f32 %v1470, %v2421
      %v2840 = vmul.f32 %v2808, 0.25
      %v2841 = vmul.f32 %v2809, 0.25
      %v2842 = vmul.f32 %v2810, 0.25
      %v2843 = vmul.f32 %v2811, 0.25
      %v2844 = vmul.f32 %v2812, 0.25
      %v2845 = vmul.f32 %v2813, 0.25
      %v2846 = vmul.f32 %v2814, 0.25
      %v2847 = vmul.f32 %v2815, 0.25
      %v2848 = vmul.f32 %v2816, 0.25
      %v2849 = vmul.f32 %v2817, 0.25
      %v2850 = vmul.f32 %v2818, 0.25
      %v2851 = vmul.f32 %v2819, 0.25
      %v2852 = vmul.f32 %v2820, 0.25
      %v2853 = vmul.f32 %v2821, 0.25
      %v2854 = vmul.f32 %v2822, 0.25
      %v2855 = vmul.f32 %v2823, 0.25
      %v2856 = vmul.f32 %v2824, 0.25
      %v2857 = vmul.f32 %v2825, 0.25
      %v2858 = vmul.f32 %v2826, 0.25
      %v2859 = vmul.f32 %v2827, 0.25
      %v2860 = vmul.f32 %v2828, 0.25
      %v2861 = vmul.f32 %v2829, 0.25
      %v2862 = vmul.f32 %v2830, 0.25
      %v2863 = vmul.f32 %v2831, 0.25
      %v2864 = vmul.f32 %v2832, 0.25
      %v2865 = vmul.f32 %v2833, 0.25
      %v2866 = vmul.f32 %v2834, 0.25
      %v2867 = vmul.f32 %v2835, 0.25
      %v2868 = vmul.f32 %v2836, 0.25
      %v2869 = vmul.f32 %v2837, 0.25
      %v2870 = vmul.f32 %v2838, 0.25
      %v2871 = vmul.f32 %v2839, 0.25
      %2904 = vset.pattern.permute.xlu0 0
      %2905 = vperm.xlu0 %2904, %v2840
      %v2906 = vpop.permute.xlu0 %2905
      %2907 = vset.pattern.permute.xlu0 0
      %2908 = vperm.xlu0 %2907, %v2841
      %v2909 = vpop.permute.xlu0 %2908
      %2910 = vset.pattern.permute.xlu0 0
      %2911 = vperm.xlu0 %2910, %v2842
      %v2912 = vpop.permute.xlu0 %2911
      %2913 = vset.pattern.permute.xlu0 0
      %2914 = vperm.xlu0 %2913, %v2843
      %v2915 = vpop.permute.xlu0 %2914
      %2916 = vset.pattern.permute.xlu0 0
      %2917 = vperm.xlu0 %2916, %v2844
      %v2918 = vpop.permute.xlu0 %2917
      %2919 = vset.pattern.permute.xlu0 0
      %2920 = vperm.xlu0 %2919, %v2845
      %v2921 = vpop.permute.xlu0 %2920
      %2922 = vset.pattern.permute.xlu0 0
      %2923 = vperm.xlu0 %2922, %v2846
      %v2924 = vpop.permute.xlu0 %2923
      %2925 = vset.pattern.permute.xlu0 0
      %2926 = vperm.xlu0 %2925, %v2847
      %v2927 = vpop.permute.xlu0 %2926
      %2928 = vset.pattern.permute.xlu0 0
      %2929 = vperm.xlu0 %2928, %v2848
      %v2930 = vpop.permute.xlu0 %2929
      %2931 = vset.pattern.permute.xlu0 0
      %2932 = vperm.xlu0 %2931, %v2849
      %v2933 = vpop.permute.xlu0 %2932
      %2934 = vset.pattern.permute.xlu0 0
      %2935 = vperm.xlu0 %2934, %v2850
      %v2936 = vpop.permute.xlu0 %2935
      %2937 = vset.pattern.permute.xlu0 0
      %2938 = vperm.xlu0 %2937, %v2851
      %v2939 = vpop.permute.xlu0 %2938
      %2940 = vset.pattern.permute.xlu0 0
      %2941 = vperm.xlu0 %2940, %v2852
      %v2942 = vpop.permute.xlu0 %2941
      %2943 = vset.pattern.permute.xlu0 0
      %2944 = vperm.xlu0 %2943, %v2853
      %v2945 = vpop.permute.xlu0 %2944
      %2946 = vset.pattern.permute.xlu0 0
      %2947 = vperm.xlu0 %2946, %v2854
      %v2948 = vpop.permute.xlu0 %2947
      %2949 = vset.pattern.permute.xlu0 0
      %2950 = vperm.xlu0 %2949, %v2855
      %v2951 = vpop.permute.xlu0 %2950
      %2952 = vset.pattern.permute.xlu0 0
      %2953 = vperm.xlu0 %2952, %v2856
      %v2954 = vpop.permute.xlu0 %2953
      %2955 = vset.pattern.permute.xlu0 0
      %2956 = vperm.xlu0 %2955, %v2857
      %v2957 = vpop.permute.xlu0 %2956
      %2958 = vset.pattern.permute.xlu0 0
      %2959 = vperm.xlu0 %2958, %v2858
      %v2960 = vpop.permute.xlu0 %2959
      %2961 = vset.pattern.permute.xlu0 0
      %2962 = vperm.xlu0 %2961, %v2859
      %v2963 = vpop.permute.xlu0 %2962
      %2964 = vset.pattern.permute.xlu0 0
      %2965 = vperm.xlu0 %2964, %v2860
      %v2966 = vpop.permute.xlu0 %2965
      %2967 = vset.pattern.permute.xlu0 0
      %2968 = vperm.xlu0 %2967, %v2861
      %v2969 = vpop.permute.xlu0 %2968
      %2970 = vset.pattern.permute.xlu0 0
      %2971 = vperm.xlu0 %2970, %v2862
      %v2972 = vpop.permute.xlu0 %2971
      %2973 = vset.pattern.permute.xlu0 0
      %2974 = vperm.xlu0 %2973, %v2863
      %v2975 = vpop.permute.xlu0 %2974
      %2976 = vset.pattern.permute.xlu0 0
      %2977 = vperm.xlu0 %2976, %v2864
      %v2978 = vpop.permute.xlu0 %2977
      %2979 = vset.pattern.permute.xlu0 0
      %2980 = vperm.xlu0 %2979, %v2865
      %v2981 = vpop.permute.xlu0 %2980
      %2982 = vset.pattern.permute.xlu0 0
      %2983 = vperm.xlu0 %2982, %v2866
      %v2984 = vpop.permute.xlu0 %2983
      %2985 = vset.pattern.permute.xlu0 0
      %2986 = vperm.xlu0 %2985, %v2867
      %v2987 = vpop.permute.xlu0 %2986
      %2988 = vset.pattern.permute.xlu0 0
      %2989 = vperm.xlu0 %2988, %v2868
      %v2990 = vpop.permute.xlu0 %2989
      %2991 = vset.pattern.permute.xlu0 0
      %2992 = vperm.xlu0 %2991, %v2869
      %v2993 = vpop.permute.xlu0 %2992
      %2994 = vset.pattern.permute.xlu0 0
      %2995 = vperm.xlu0 %2994, %v2870
      %v2996 = vpop.permute.xlu0 %2995
      %2997 = vset.pattern.permute.xlu0 0
      %2998 = vperm.xlu0 %2997, %v2871
      %v2999 = vpop.permute.xlu0 %2998
      %v3000 = vlaneseq
      %v3001 = vshrl.u32 %v3000, 7
      %v3002 = vsub.s32 %v1792, %v3001
      %v3003 = vrot.slane %v2906, %v3002
      %v3004 = vlaneseq
      %v3005 = vshrl.u32 %v3004, 7
      %v3006 = vsub.s32 %v1797, %v3005
      %v3007 = vrot.slane %v2909, %v3006
      %v3008 = vsel %vm1802, %v3007, %v3003
      %v3009 = vlaneseq
      %v3010 = vshrl.u32 %v3009, 7
      %v3011 = vsub.s32 %v1804, %v3010
      %v3012 = vrot.slane %v2912, %v3011
      %v3013 = vsel %vm1809, %v3012, %v3008
      %v3014 = vlaneseq
      %v3015 = vshrl.u32 %v3014, 7
      %v3016 = vsub.s32 %v1811, %v3015
      %v3017 = vrot.slane %v2915, %v3016
      %v3018 = vsel %vm1816, %v3017, %v3013
      %v3019 = vlaneseq
      %v3020 = vshrl.u32 %v3019, 7
      %v3021 = vsub.s32 %v1818, %v3020
      %v3022 = vrot.slane %v2918, %v3021
      %v3023 = vsel %vm1823, %v3022, %v3018
      %v3024 = vlaneseq
      %v3025 = vshrl.u32 %v3024, 7
      %v3026 = vsub.s32 %v1825, %v3025
      %v3027 = vrot.slane %v2921, %v3026
      %v3028 = vsel %vm1830, %v3027, %v3023
      %v3029 = vlaneseq
      %v3030 = vshrl.u32 %v3029, 7
      %v3031 = vsub.s32 %v1832, %v3030
      %v3032 = vrot.slane %v2924, %v3031
      %v3033 = vsel %vm1837, %v3032, %v3028
      %v3034 = vlaneseq
      %v3035 = vshrl.u32 %v3034, 7
      %v3036 = vsub.s32 %v1839, %v3035
      %v3037 = vrot.slane %v2927, %v3036
      %v3038 = vsel %vm1844, %v3037, %v3033
      %v3039 = vlaneseq
      %v3040 = vshrl.u32 %v3039, 7
      %v3041 = vsub.s32 %v1792, %v3040
      %v3042 = vrot.slane %v2930, %v3041
      %v3043 = vlaneseq
      %v3044 = vshrl.u32 %v3043, 7
      %v3045 = vsub.s32 %v1797, %v3044
      %v3046 = vrot.slane %v2933, %v3045
      %v3047 = vsel %vm1802, %v3046, %v3042
      %v3048 = vlaneseq
      %v3049 = vshrl.u32 %v3048, 7
      %v3050 = vsub.s32 %v1804, %v3049
      %v3051 = vrot.slane %v2936, %v3050
      %v3052 = vsel %vm1809, %v3051, %v3047
      %v3053 = vlaneseq
      %v3054 = vshrl.u32 %v3053, 7
      %v3055 = vsub.s32 %v1811, %v3054
      %v3056 = vrot.slane %v2939, %v3055
      %v3057 = vsel %vm1816, %v3056, %v3052
      %v3058 = vlaneseq
      %v3059 = vshrl.u32 %v3058, 7
      %v3060 = vsub.s32 %v1818, %v3059
      %v3061 = vrot.slane %v2942, %v3060
      %v3062 = vsel %vm1823, %v3061, %v3057
      %v3063 = vlaneseq
      %v3064 = vshrl.u32 %v3063, 7
      %v3065 = vsub.s32 %v1825, %v3064
      %v3066 = vrot.slane %v2945, %v3065
      %v3067 = vsel %vm1830, %v3066, %v3062
      %v3068 = vlaneseq
      %v3069 = vshrl.u32 %v3068, 7
      %v3070 = vsub.s32 %v1832, %v3069
      %v3071 = vrot.slane %v2948, %v3070
      %v3072 = vsel %vm1837, %v3071, %v3067
      %v3073 = vlaneseq
      %v3074 = vshrl.u32 %v3073, 7
      %v3075 = vsub.s32 %v1839, %v3074
      %v3076 = vrot.slane %v2951, %v3075
      %v3077 = vsel %vm1844, %v3076, %v3072
      %v3078 = vlaneseq
      %v3079 = vshrl.u32 %v3078, 7
      %v3080 = vsub.s32 %v1792, %v3079
      %v3081 = vrot.slane %v2954, %v3080
      %v3082 = vlaneseq
      %v3083 = vshrl.u32 %v3082, 7
      %v3084 = vsub.s32 %v1797, %v3083
      %v3085 = vrot.slane %v2957, %v3084
      %v3086 = vsel %vm1802, %v3085, %v3081
      %v3087 = vlaneseq
      %v3088 = vshrl.u32 %v3087, 7
      %v3089 = vsub.s32 %v1804, %v3088
      %v3090 = vrot.slane %v2960, %v3089
      %v3091 = vsel %vm1809, %v3090, %v3086
      %v3092 = vlaneseq
      %v3093 = vshrl.u32 %v3092, 7
      %v3094 = vsub.s32 %v1811, %v3093
      %v3095 = vrot.slane %v2963, %v3094
      %v3096 = vsel %vm1816, %v3095, %v3091
      %v3097 = vlaneseq
      %v3098 = vshrl.u32 %v3097, 7
      %v3099 = vsub.s32 %v1818, %v3098
      %v3100 = vrot.slane %v2966, %v3099
      %v3101 = vsel %vm1823, %v3100, %v3096
      %v3102 = vlaneseq
      %v3103 = vshrl.u32 %v3102, 7
      %v3104 = vsub.s32 %v1825, %v3103
      %v3105 = vrot.slane %v2969, %v3104
      %v3106 = vsel %vm1830, %v3105, %v3101
      %v3107 = vlaneseq
      %v3108 = vshrl.u32 %v3107, 7
      %v3109 = vsub.s32 %v1832, %v3108
      %v3110 = vrot.slane %v2972, %v3109
      %v3111 = vsel %vm1837, %v3110, %v3106
      %v3112 = vlaneseq
      %v3113 = vshrl.u32 %v3112, 7
      %v3114 = vsub.s32 %v1839, %v3113
      %v3115 = vrot.slane %v2975, %v3114
      %v3116 = vsel %vm1844, %v3115, %v3111
      %v3117 = vlaneseq
      %v3118 = vshrl.u32 %v3117, 7
      %v3119 = vsub.s32 %v1792, %v3118
      %v3120 = vrot.slane %v2978, %v3119
      %v3121 = vlaneseq
      %v3122 = vshrl.u32 %v3121, 7
      %v3123 = vsub.s32 %v1797, %v3122
      %v3124 = vrot.slane %v2981, %v3123
      %v3125 = vsel %vm1802, %v3124, %v3120
      %v3126 = vlaneseq
      %v3127 = vshrl.u32 %v3126, 7
      %v3128 = vsub.s32 %v1804, %v3127
      %v3129 = vrot.slane %v2984, %v3128
      %v3130 = vsel %vm1809, %v3129, %v3125
      %v3131 = vlaneseq
      %v3132 = vshrl.u32 %v3131, 7
      %v3133 = vsub.s32 %v1811, %v3132
      %v3134 = vrot.slane %v2987, %v3133
      %v3135 = vsel %vm1816, %v3134, %v3130
      %v3136 = vlaneseq
      %v3137 = vshrl.u32 %v3136, 7
      %v3138 = vsub.s32 %v1818, %v3137
      %v3139 = vrot.slane %v2990, %v3138
      %v3140 = vsel %vm1823, %v3139, %v3135
      %v3141 = vlaneseq
      %v3142 = vshrl.u32 %v3141, 7
      %v3143 = vsub.s32 %v1825, %v3142
      %v3144 = vrot.slane %v2993, %v3143
      %v3145 = vsel %vm1830, %v3144, %v3140
      %v3146 = vlaneseq
      %v3147 = vshrl.u32 %v3146, 7
      %v3148 = vsub.s32 %v1832, %v3147
      %v3149 = vrot.slane %v2996, %v3148
      %v3150 = vsel %vm1837, %v3149, %v3145
      %v3151 = vlaneseq
      %v3152 = vshrl.u32 %v3151, 7
      %v3153 = vsub.s32 %v1839, %v3152
      %v3154 = vrot.slane %v2999, %v3153
      %v3155 = vsel %vm1844, %v3154, %v3150
      %v3156 = vsel %vm1963, %v3077, %v3038
      %v3157 = vsel %vm1965, %v3116, %v3156
      %v3158 = vsel %vm1967, %v3155, %v3157
      %s3160 = scalar_lea.vmem %s178, 12
      %3161 = vst.msk [vmem:[%s3160] sm:$0xf] %vm1970, %v3158
      %p3162 = scmp.lt.s32.totalorder %s17, 1
      %s3163 = scalar_select %p3162, %s17, 1
      %p3164 = scmp.lt.s32.totalorder %s18, 0
      %s3165 = scalar_select %p3164, %s18, 0
      %p3166 = scmp.lt.s32.totalorder %s19, 0
      %s3167 = scalar_select %p3166, %s19, 0
      %s3168 = sadd.s32 %s3167, %s3165
      %s3169 = smul.addr %s3163, 4
      %s3170 = sadd.s32 %s3168, %s3169
      %s3171 = smul.addr %s3170, 4
      %s3172 = scalar_lea.vmem %s1, %s3171
      // Predicated region
      $region25: #{_haar_downsampling_impl.1} parent=23 // pred_check
        %p3173 = pneg %p83
      $region26: #{_haar_downsampling_impl.1} parent=23 // pred_check_branch
        %3175 = sbr.rel (%p3173) target = $region28
      $region27: #{_haar_downsampling_impl.1} parent=23 // pred_region
        _
      $region28: #{_haar_downsampling_impl.1} parent=23 // pred_fallthru
        _
    $region24: #{_haar_downsampling_impl.1} parent=5 // pred_fallthru
      _
    %p3176 = scmp.le.s32.totalorder 2, %s7
    // Predicated region
    $region29: #{_haar_downsampling_impl.1} parent=5 // pred_check
      %p3177 = pneg %p3176
    $region30: #{_haar_downsampling_impl.1} parent=5 // pred_check_branch
      %3179 = sbr.rel (%p3177) target = $region32
    $region31: #{_haar_downsampling_impl.1} parent=5 // pred_region
      %s3180 = ssub.s32 %s7, 2
      // Predicated region
      $region33: #{_haar_downsampling_impl.1} parent=31 // pred_check
        %p3181 = pneg %p89
      $region34: #{_haar_downsampling_impl.1} parent=31 // pred_check_branch
        %3183 = sbr.rel (%p3181) target = $region36
      $region35: #{_haar_downsampling_impl.1} parent=31 // pred_region
        %p3184 = scmp.lt.s32.totalorder %s20, 1
        %s3185 = scalar_select %p3184, %s20, 1
        %p3186 = scmp.lt.s32.totalorder %s21, 0
        %s3187 = scalar_select %p3186, %s21, 0
        %p3188 = scmp.lt.s32.totalorder %s22, 0
        %s3189 = scalar_select %p3188, %s22, 0
        %s3190 = sadd.s32 %s3189, %s3187
        %s3191 = smul.addr %s3185, 4
        %s3192 = sadd.s32 %s3190, %s3191
        %s3193 = smul.addr %s3192, 4
        %s3194 = scalar_lea.vmem %s1, %s3193
      $region36: #{_haar_downsampling_impl.1} parent=31 // pred_fallthru
        _
    $region32: #{_haar_downsampling_impl.1} parent=5 // pred_fallthru
      _
  $region6: #{_haar_downsampling_impl.1} parent=0 // loop_footer
    %s11 = sadd.s32 1, %s7
  $region7: #{_haar_downsampling_impl.1} parent=0 // loop_footer_branch
    %6 = sbr.rel target = $region3
  $region8: #{_haar_downsampling_impl.1} parent=0 // loop_exit
    _

</llo_original>
